<compile_context>
chip_gen: v6e
topology: v6e:2x2x1
jax: 0.10.0
libtpu: 0.0.40
codegen_flags: <defaults>
</compile_context>

<pallas_src>
import functools
import math

import jax
import jax.numpy as jnp
from jax.experimental import pallas as pl
from jax.experimental.pallas import tpu as pltpu


# ----------------------------------------------------------------------------
# helpers
# ----------------------------------------------------------------------------
def _layernorm(x, w, b, eps=1e-5):
    mu = jnp.mean(x, axis=-1, keepdims=True)
    var = jnp.mean((x - mu) ** 2, axis=-1, keepdims=True)
    return (x - mu) * jax.lax.rsqrt(var + eps) * w + b


def _pick_tile(dim, candidates):
    """Largest candidate that evenly divides `dim`; otherwise the full dim."""
    for c in candidates:
        if dim >= c and dim % c == 0:
            return c
    return dim


# ----------------------------------------------------------------------------
# kernel 1: one post-norm TransformerEncoderLayer (MHA + FFN + 2x LayerNorm)
# grid = (B,), one batch element's full (S, D) slab per grid step.
# ----------------------------------------------------------------------------
def _encoder_layer_kernel(nhead, x_ref, mask_ref, wqkv_ref, bqkv_ref, wo_ref,
                          bo_ref, ln1w_ref, ln1b_ref, w1_ref, b1_ref,
                          w2_ref, b2_ref, ln2w_ref, ln2b_ref, o_ref):
    _, S, D = x_ref.shape
    hd = D // nhead
    scale = 1.0 / math.sqrt(hd)

    x = x_ref[0]                                   # (S, D)
    mask = mask_ref[...]                           # (S, S) additive causal mask

    # ---- fused QKV projection: one (S, D) @ (D, 3D) matmul -----------------
    qkv = jnp.dot(x, wqkv_ref[...], preferred_element_type=jnp.float32) \
        + bqkv_ref[...]                            # (S, 3D)

    # ---- head-batched self attention ----------------------------------------
    q = qkv[:, 0 * D:1 * D].reshape(S, nhead, hd).transpose(1, 0, 2)   # (H,S,hd)
    k = qkv[:, 1 * D:2 * D].reshape(S, nhead, hd).transpose(1, 0, 2)
    v = qkv[:, 2 * D:3 * D].reshape(S, nhead, hd).transpose(1, 0, 2)

    s = jnp.einsum('hqd,hkd->hqk', q, k,
                   preferred_element_type=jnp.float32) * scale         # (H,S,S)
    s = s + mask[None, :, :]
    m = jnp.max(s, axis=-1, keepdims=True)
    p = jnp.exp(s - m)
    p = p * pl.reciprocal(jnp.sum(p, axis=-1, keepdims=True), approx=True)
    ctx = jnp.einsum('hqk,hkd->hqd', p, v,
                     preferred_element_type=jnp.float32)                # (H,S,hd)
    ctx = ctx.transpose(1, 0, 2).reshape(S, D)                          # (S, D)

    # ---- output projection: single (S, D) @ (D, D) matmul ------------------
    attn = jnp.dot(ctx, wo_ref[...], preferred_element_type=jnp.float32) \
        + bo_ref[...]

    # dropout is identity (eval mode)
    y = _layernorm(x + attn, ln1w_ref[...], ln1b_ref[...])

    # ---- feed-forward --------------------------------------------------------
    hid = jnp.maximum(
        jnp.dot(y, w1_ref[...], preferred_element_type=jnp.float32)
        + b1_ref[...], 0.0)
    ff = jnp.dot(hid, w2_ref[...], preferred_element_type=jnp.float32) \
        + b2_ref[...]
    o_ref[0] = _layernorm(y + ff, ln2w_ref[...], ln2b_ref[...])


def encoder_layer(x, mask, p, nhead):
    """x: (B, S, D) batch-first activations."""
    B, S, D = x.shape
    args = (x, mask, p["wqkv_t"], p["bqkv"], p["wo_t"], p["bo"],
            p["ln1w"], p["ln1b"], p["w1_t"], p["b1"], p["w2_t"], p["b2"],
            p["ln2w"], p["ln2b"])

    def const_spec(shape):
        n = len(shape)
        return pl.BlockSpec(shape, lambda b, _n=n: (0,) * _n)

    in_specs = [pl.BlockSpec((1, S, D), lambda b: (b, 0, 0))]
    in_specs += [const_spec(a.shape) for a in args[1:]]

    return pl.pallas_call(
        functools.partial(_encoder_layer_kernel, nhead),
        out_shape=jax.ShapeDtypeStruct((B, S, D), jnp.float32),
        grid=(B,),
        in_specs=in_specs,
        out_specs=pl.BlockSpec((1, S, D), lambda b: (b, 0, 0)),
        compiler_params=pltpu.CompilerParams(dimension_semantics=("parallel",)),
    )(*args)


# ----------------------------------------------------------------------------
# kernel 2: tiled decoder matmul  (M, D) @ (D, Vp) + b  with f32 accumulator
# ----------------------------------------------------------------------------
def _decoder_kernel(x_ref, w_ref, b_ref, o_ref, acc_ref):
    @pl.when(pl.program_id(2) == 0)
    def _():
        acc_ref[...] = jnp.zeros_like(acc_ref)

    acc_ref[...] += jnp.dot(x_ref[...], w_ref[...],
                            preferred_element_type=jnp.float32)

    @pl.when(pl.program_id(2) == pl.num_programs(2) - 1)
    def _():
        o_ref[...] = acc_ref[...] + b_ref[...]


def decoder(x, w_t, b):
    """x: (M, D), w_t: (D, Vp), b: (1, Vp) with Vp a multiple of 128."""
    M, D = x.shape
    Vp = w_t.shape[1]
    tm = _pick_tile(M, (256, 128, 64, 32, 16, 8))
    tn = _pick_tile(Vp, (512, 256, 128))
    tk = _pick_tile(D, (512, 256, 128))
    grid = (M // tm, Vp // tn, D // tk)
    return pl.pallas_call(
        _decoder_kernel,
        out_shape=jax.ShapeDtypeStruct((M, Vp), jnp.float32),
        grid=grid,
        in_specs=[pl.BlockSpec((tm, tk), lambda i, j, k: (i, k)),
                  pl.BlockSpec((tk, tn), lambda i, j, k: (k, j)),
                  pl.BlockSpec((1, tn), lambda i, j, k: (0, j))],
        out_specs=pl.BlockSpec((tm, tn), lambda i, j, k: (i, j)),
        scratch_shapes=[pltpu.VMEM((tm, tn), jnp.float32)],
        compiler_params=pltpu.CompilerParams(
            dimension_semantics=("parallel", "parallel", "arbitrary")),
    )(x, w_t, b)


# ----------------------------------------------------------------------------
# model glue: params, positional encoding, mask, forward
# ----------------------------------------------------------------------------
def positional_encoding(max_len, d_model):
    position = jnp.arange(max_len, dtype=jnp.float32)[:, None]
    div_term = jnp.exp(jnp.arange(0, d_model, 2, dtype=jnp.float32)
                       * (-math.log(10000.0) / d_model))
    pe = jnp.zeros((max_len, d_model), jnp.float32)
    pe = pe.at[:, 0::2].set(jnp.sin(position * div_term))
    pe = pe.at[:, 1::2].set(jnp.cos(position * div_term))
    return pe[:, None, :]                          # (max_len, 1, d_model)


def causal_mask(S):
    i = jnp.arange(S)[:, None]
    j = jnp.arange(S)[None, :]
    return jnp.where(j <= i, 0.0, -jnp.inf).astype(jnp.float32)


def init_params(key, ntoken, ninp, nhid, nlayers, max_len=256):
    keys = jax.random.split(key, 3 + nlayers)
    initrange = 0.1

    def xav(k, shape):
        lim = math.sqrt(6.0 / (shape[0] + shape[1]))
        return jax.random.uniform(k, shape, jnp.float32, -lim, lim)

    D, H = ninp, nhid
    vpad = ((ntoken + 127) // 128) * 128           # lane-dense decoder output

    dec_w = jax.random.uniform(keys[1], (ntoken, ninp), jnp.float32,
                               -initrange, initrange)
    dec_w_t = jnp.zeros((ninp, vpad), jnp.float32).at[:, :ntoken].set(dec_w.T)

    params = {
        "embedding": jax.random.uniform(keys[0], (ntoken, ninp), jnp.float32,
                                        -initrange, initrange),
        "dec_w_t": dec_w_t,                        # (D, Vp) pre-transposed+padded
        "dec_b": jnp.zeros((1, vpad), jnp.float32),
        "pe": positional_encoding(max_len, ninp),
        "layers": [],
    }
    for l in range(nlayers):
        lk = jax.random.split(keys[3 + l], 4)
        params["layers"].append({
            # all weights stored pre-transposed (ready for x @ W)
            "wqkv_t": xav(lk[0], (3 * D, D)).T,    # (D, 3D)
            "bqkv": jnp.zeros((1, 3 * D), jnp.float32),
            "wo_t": xav(lk[1], (D, D)).T,          # (D, D)
            "bo": jnp.zeros((1, D), jnp.float32),
            "ln1w": jnp.ones((1, D), jnp.float32),
            "ln1b": jnp.zeros((1, D), jnp.float32),
            "w1_t": xav(lk[2], (H, D)).T,          # (D, H)
            "b1": jnp.zeros((1, H), jnp.float32),
            "w2_t": xav(lk[3], (D, H)).T,          # (H, D)
            "b2": jnp.zeros((1, D), jnp.float32),
            "ln2w": jnp.ones((1, D), jnp.float32),
            "ln2b": jnp.zeros((1, D), jnp.float32),
        })
    return params


def transformer_forward(params, src, src_mask, nhead):
    S, B = src.shape
    V, D = params["embedding"].shape

    # Embedding gather + sqrt(D) scale + positional encoding: memory-bound
    # elementwise glue, fused by XLA (no dedicated pallas_call).
    x = params["embedding"][src] * math.sqrt(D) + params["pe"][:S]   # (S, B, D)
    x = jnp.transpose(x, (1, 0, 2))                                  # (B, S, D)

    for layer_params in params["layers"]:
        x = encoder_layer(x, src_mask, layer_params, nhead)

    logits = decoder(x.reshape(B * S, D), params["dec_w_t"], params["dec_b"])
    logits = logits[:, :V].reshape(B, S, V)
    return jnp.transpose(logits, (1, 0, 2))                          # (S, B, V)


# ----------------------------------------------------------------------------
if __name__ == "__main__":
    ntoken, ninp, nhead, nhid, nlayers = 50, 32, 4, 64, 2
    S, B = 8, 2

    key = jax.random.PRNGKey(0)
    k_src, k_params = jax.random.split(key)
    src = jax.random.randint(k_src, (S, B), 0, ntoken, dtype=jnp.int32)
    src_mask = causal_mask(S)
    params = init_params(k_params, ntoken, ninp, nhead and nhid, nlayers)

    out = transformer_forward(params, src, src_mask, nhead)
    out = jax.block_until_ready(out)

    assert out.shape == (S, B, ntoken), out.shape
    assert bool(jnp.all(jnp.isfinite(out)))
    print("KERNEL_OK")
</pallas_src>

<mosaic_0001>
module attributes {stable_mosaic.version = 11 : i64} {
  func.func @_encoder_layer_kernel(%arg0: i32, %arg1: memref<1x8x32xf32, #tpu.memory_space<vmem>>, %arg2: memref<8x8xf32, #tpu.memory_space<vmem>>, %arg3: memref<32x96xf32, #tpu.memory_space<vmem>>, %arg4: memref<1x96xf32, #tpu.memory_space<vmem>>, %arg5: memref<32x32xf32, #tpu.memory_space<vmem>>, %arg6: memref<1x32xf32, #tpu.memory_space<vmem>>, %arg7: memref<1x32xf32, #tpu.memory_space<vmem>>, %arg8: memref<1x32xf32, #tpu.memory_space<vmem>>, %arg9: memref<32x64xf32, #tpu.memory_space<vmem>>, %arg10: memref<1x64xf32, #tpu.memory_space<vmem>>, %arg11: memref<64x32xf32, #tpu.memory_space<vmem>>, %arg12: memref<1x32xf32, #tpu.memory_space<vmem>>, %arg13: memref<1x32xf32, #tpu.memory_space<vmem>>, %arg14: memref<1x32xf32, #tpu.memory_space<vmem>>, %arg15: memref<1x8x32xf32, #tpu.memory_space<vmem>>) attributes {dimension_semantics = [#tpu.dimension_semantics<parallel>], iteration_bounds = array<i64: 2>, scalar_prefetch = 0 : i64, scratch_operands = 0 : i64, tpu.core_type = #tpu.core_type<tc>, window_params = [{transform_indices = @transform_0, window_bounds = array<i64: 1, 8, 32>}, {pipeline_mode = #tpu.pipeline_mode<synchronous>, transform_indices = @transform_1, window_bounds = array<i64: 8, 8>}, {pipeline_mode = #tpu.pipeline_mode<synchronous>, transform_indices = @transform_2, window_bounds = array<i64: 32, 96>}, {pipeline_mode = #tpu.pipeline_mode<synchronous>, transform_indices = @transform_3, window_bounds = array<i64: 1, 96>}, {pipeline_mode = #tpu.pipeline_mode<synchronous>, transform_indices = @transform_4, window_bounds = array<i64: 32, 32>}, {pipeline_mode = #tpu.pipeline_mode<synchronous>, transform_indices = @transform_5, window_bounds = array<i64: 1, 32>}, {pipeline_mode = #tpu.pipeline_mode<synchronous>, transform_indices = @transform_6, window_bounds = array<i64: 1, 32>}, {pipeline_mode = #tpu.pipeline_mode<synchronous>, transform_indices = @transform_7, window_bounds = array<i64: 1, 32>}, {pipeline_mode = #tpu.pipeline_mode<synchronous>, transform_indices = @transform_8, window_bounds = array<i64: 32, 64>}, {pipeline_mode = #tpu.pipeline_mode<synchronous>, transform_indices = @transform_9, window_bounds = array<i64: 1, 64>}, {pipeline_mode = #tpu.pipeline_mode<synchronous>, transform_indices = @transform_10, window_bounds = array<i64: 64, 32>}, {pipeline_mode = #tpu.pipeline_mode<synchronous>, transform_indices = @transform_11, window_bounds = array<i64: 1, 32>}, {pipeline_mode = #tpu.pipeline_mode<synchronous>, transform_indices = @transform_12, window_bounds = array<i64: 1, 32>}, {pipeline_mode = #tpu.pipeline_mode<synchronous>, transform_indices = @transform_13, window_bounds = array<i64: 1, 32>}, {transform_indices = @transform_14, window_bounds = array<i64: 1, 8, 32>}]} {
    %c0 = arith.constant 0 : index
    %c0_0 = arith.constant 0 : index
    %c0_1 = arith.constant 0 : index
    %0 = vector.load %arg1[%c0, %c0_0, %c0_1] : memref<1x8x32xf32, #tpu.memory_space<vmem>>, vector<1x8x32xf32>
    %1 = vector.shape_cast %0 : vector<1x8x32xf32> to vector<8x32xf32>
    %c0_2 = arith.constant 0 : index
    %c0_3 = arith.constant 0 : index
    %2 = vector.load %arg2[%c0_2, %c0_3] : memref<8x8xf32, #tpu.memory_space<vmem>>, vector<8x8xf32>
    %c0_4 = arith.constant 0 : index
    %c0_5 = arith.constant 0 : index
    %3 = vector.load %arg3[%c0_4, %c0_5] : memref<32x96xf32, #tpu.memory_space<vmem>>, vector<32x96xf32>
    %cst = arith.constant dense<0.000000e+00> : vector<8x96xf32>
    %4 = tpu.matmul %1, %3, %cst {dimension_numbers = #tpu.dot_dimension_numbers<[1], [0], [0], [1], [0, 0, 1, 1], [], []>} : vector<8x32xf32>, vector<32x96xf32>, vector<8x96xf32> -> vector<8x96xf32>
    %c0_6 = arith.constant 0 : index
    %c0_7 = arith.constant 0 : index
    %5 = vector.load %arg4[%c0_6, %c0_7] : memref<1x96xf32, #tpu.memory_space<vmem>>, vector<1x96xf32>
    %6 = vector.broadcast %5 : vector<1x96xf32> to vector<8x96xf32>
    %7 = arith.addf %4, %6 : vector<8x96xf32>
    %8 = vector.extract_strided_slice %7 {offsets = [0, 0], sizes = [8, 32], strides = [1, 1]} : vector<8x96xf32> to vector<8x32xf32>
    %9 = vector.shape_cast %8 : vector<8x32xf32> to vector<8x4x8xf32>
    %10 = tpu.transpose %9, [1, 0, 2] : vector<8x4x8xf32> -> vector<4x8x8xf32>
    %11 = vector.extract_strided_slice %7 {offsets = [0, 32], sizes = [8, 32], strides = [1, 1]} : vector<8x96xf32> to vector<8x32xf32>
    %12 = vector.shape_cast %11 : vector<8x32xf32> to vector<8x4x8xf32>
    %13 = tpu.transpose %12, [1, 0, 2] : vector<8x4x8xf32> -> vector<4x8x8xf32>
    %14 = vector.extract_strided_slice %7 {offsets = [0, 64], sizes = [8, 32], strides = [1, 1]} : vector<8x96xf32> to vector<8x32xf32>
    %15 = vector.shape_cast %14 : vector<8x32xf32> to vector<8x4x8xf32>
    %16 = tpu.transpose %15, [1, 0, 2] : vector<8x4x8xf32> -> vector<4x8x8xf32>
    "tpu.trace_start"() <{level = 10 : i32, message = "hqd,hkd->hqk"}> : () -> ()
    %cst_8 = arith.constant dense<0.000000e+00> : vector<4x8x8xf32>
    %17 = tpu.matmul %10, %13, %cst_8 {dimension_numbers = #tpu.dot_dimension_numbers<[2], [2], [1], [1], [0, 0, 0, 1, 1, 1], [0], [0]>} : vector<4x8x8xf32>, vector<4x8x8xf32>, vector<4x8x8xf32> -> vector<4x8x8xf32>
    "tpu.trace_stop"() : () -> ()
    %cst_9 = arith.constant 0.353553385 : f32
    %18 = vector.broadcast %cst_9 : f32 to vector<4x8x8xf32>
    %19 = arith.mulf %17, %18 : vector<4x8x8xf32>
    %20 = vector.shape_cast %2 : vector<8x8xf32> to vector<1x8x8xf32>
    %21 = vector.broadcast %20 : vector<1x8x8xf32> to vector<4x8x8xf32>
    %22 = arith.addf %19, %21 : vector<4x8x8xf32>
    %cst_10 = arith.constant dense<0xFF800000> : vector<4x8xf32>
    %23 = vector.multi_reduction <maximumf>, %22, %cst_10 [2] : vector<4x8x8xf32> to vector<4x8xf32>
    %24 = vector.shape_cast %23 : vector<4x8xf32> to vector<4x8x1xf32>
    %25 = vector.broadcast %24 : vector<4x8x1xf32> to vector<4x8x8xf32>
    %26 = arith.subf %22, %25 : vector<4x8x8xf32>
    %27 = math.exp %26 : vector<4x8x8xf32>
    %cst_11 = arith.constant dense<0.000000e+00> : vector<4x8xf32>
    %28 = vector.multi_reduction <add>, %27, %cst_11 [2] : vector<4x8x8xf32> to vector<4x8xf32>
    %29 = vector.shape_cast %28 : vector<4x8xf32> to vector<4x8x1xf32>
    %30 = tpu.reciprocal %29 {approx = true} : vector<4x8x1xf32> -> vector<4x8x1xf32>
    %31 = vector.broadcast %30 : vector<4x8x1xf32> to vector<4x8x8xf32>
    %32 = arith.mulf %27, %31 : vector<4x8x8xf32>
    "tpu.trace_start"() <{level = 10 : i32, message = "hqk,hkd->hqd"}> : () -> ()
    %cst_12 = arith.constant dense<0.000000e+00> : vector<4x8x8xf32>
    %33 = tpu.matmul %32, %16, %cst_12 {dimension_numbers = #tpu.dot_dimension_numbers<[2], [1], [1], [2], [0, 0, 0, 1, 1, 2], [0], [0]>} : vector<4x8x8xf32>, vector<4x8x8xf32>, vector<4x8x8xf32> -> vector<4x8x8xf32>
    "tpu.trace_stop"() : () -> ()
    %34 = tpu.transpose %33, [1, 0, 2] : vector<4x8x8xf32> -> vector<8x4x8xf32>
    %35 = vector.shape_cast %34 : vector<8x4x8xf32> to vector<8x32xf32>
    %c0_13 = arith.constant 0 : index
    %c0_14 = arith.constant 0 : index
    %36 = vector.load %arg5[%c0_13, %c0_14] : memref<32x32xf32, #tpu.memory_space<vmem>>, vector<32x32xf32>
    %cst_15 = arith.constant dense<0.000000e+00> : vector<8x32xf32>
    %37 = tpu.matmul %35, %36, %cst_15 {dimension_numbers = #tpu.dot_dimension_numbers<[1], [0], [0], [1], [0, 0, 1, 1], [], []>} : vector<8x32xf32>, vector<32x32xf32>, vector<8x32xf32> -> vector<8x32xf32>
    %c0_16 = arith.constant 0 : index
    %c0_17 = arith.constant 0 : index
    %38 = vector.load %arg6[%c0_16, %c0_17] : memref<1x32xf32, #tpu.memory_space<vmem>>, vector<1x32xf32>
    %39 = vector.broadcast %38 : vector<1x32xf32> to vector<8x32xf32>
    %40 = arith.addf %37, %39 : vector<8x32xf32>
    %41 = arith.addf %1, %40 : vector<8x32xf32>
    %c0_18 = arith.constant 0 : index
    %c0_19 = arith.constant 0 : index
    %42 = vector.load %arg7[%c0_18, %c0_19] : memref<1x32xf32, #tpu.memory_space<vmem>>, vector<1x32xf32>
    %c0_20 = arith.constant 0 : index
    %c0_21 = arith.constant 0 : index
    %43 = vector.load %arg8[%c0_20, %c0_21] : memref<1x32xf32, #tpu.memory_space<vmem>>, vector<1x32xf32>
    %cst_22 = arith.constant dense<0.000000e+00> : vector<8xf32>
    %44 = vector.multi_reduction <add>, %41, %cst_22 [1] : vector<8x32xf32> to vector<8xf32>
    %45 = vector.shape_cast %44 : vector<8xf32> to vector<8x1xf32>
    %cst_23 = arith.constant 3.200000e+01 : f32
    %46 = vector.broadcast %cst_23 : f32 to vector<8x1xf32>
    %47 = arith.divf %45, %46 : vector<8x1xf32>
    %48 = vector.broadcast %47 : vector<8x1xf32> to vector<8x32xf32>
    %49 = arith.subf %41, %48 : vector<8x32xf32>
    %50 = arith.mulf %49, %49 : vector<8x32xf32>
    %cst_24 = arith.constant dense<0.000000e+00> : vector<8xf32>
    %51 = vector.multi_reduction <add>, %50, %cst_24 [1] : vector<8x32xf32> to vector<8xf32>
    %52 = vector.shape_cast %51 : vector<8xf32> to vector<8x1xf32>
    %cst_25 = arith.constant 3.200000e+01 : f32
    %53 = vector.broadcast %cst_25 : f32 to vector<8x1xf32>
    %54 = arith.divf %52, %53 : vector<8x1xf32>
    %55 = vector.broadcast %47 : vector<8x1xf32> to vector<8x32xf32>
    %56 = arith.subf %41, %55 : vector<8x32xf32>
    %cst_26 = arith.constant 9.99999974E-6 : f32
    %57 = vector.broadcast %cst_26 : f32 to vector<8x1xf32>
    %58 = arith.addf %54, %57 : vector<8x1xf32>
    %59 = math.rsqrt %58 : vector<8x1xf32>
    %60 = vector.broadcast %59 : vector<8x1xf32> to vector<8x32xf32>
    %61 = arith.mulf %56, %60 : vector<8x32xf32>
    %62 = vector.broadcast %42 : vector<1x32xf32> to vector<8x32xf32>
    %63 = arith.mulf %61, %62 : vector<8x32xf32>
    %64 = vector.broadcast %43 : vector<1x32xf32> to vector<8x32xf32>
    %65 = arith.addf %63, %64 : vector<8x32xf32>
    %c0_27 = arith.constant 0 : index
    %c0_28 = arith.constant 0 : index
    %66 = vector.load %arg9[%c0_27, %c0_28] : memref<32x64xf32, #tpu.memory_space<vmem>>, vector<32x64xf32>
    %cst_29 = arith.constant dense<0.000000e+00> : vector<8x64xf32>
    %67 = tpu.matmul %65, %66, %cst_29 {dimension_numbers = #tpu.dot_dimension_numbers<[1], [0], [0], [1], [0, 0, 1, 1], [], []>} : vector<8x32xf32>, vector<32x64xf32>, vector<8x64xf32> -> vector<8x64xf32>
    %c0_30 = arith.constant 0 : index
    %c0_31 = arith.constant 0 : index
    %68 = vector.load %arg10[%c0_30, %c0_31] : memref<1x64xf32, #tpu.memory_space<vmem>>, vector<1x64xf32>
    %69 = vector.broadcast %68 : vector<1x64xf32> to vector<8x64xf32>
    %70 = arith.addf %67, %69 : vector<8x64xf32>
    %cst_32 = arith.constant 0.000000e+00 : f32
    %71 = vector.broadcast %cst_32 : f32 to vector<8x64xf32>
    %72 = arith.maximumf %70, %71 : vector<8x64xf32>
    %c0_33 = arith.constant 0 : index
    %c0_34 = arith.constant 0 : index
    %73 = vector.load %arg11[%c0_33, %c0_34] : memref<64x32xf32, #tpu.memory_space<vmem>>, vector<64x32xf32>
    %cst_35 = arith.constant dense<0.000000e+00> : vector<8x32xf32>
    %74 = tpu.matmul %72, %73, %cst_35 {dimension_numbers = #tpu.dot_dimension_numbers<[1], [0], [0], [1], [0, 0, 1, 1], [], []>} : vector<8x64xf32>, vector<64x32xf32>, vector<8x32xf32> -> vector<8x32xf32>
    %c0_36 = arith.constant 0 : index
    %c0_37 = arith.constant 0 : index
    %75 = vector.load %arg12[%c0_36, %c0_37] : memref<1x32xf32, #tpu.memory_space<vmem>>, vector<1x32xf32>
    %76 = vector.broadcast %75 : vector<1x32xf32> to vector<8x32xf32>
    %77 = arith.addf %74, %76 : vector<8x32xf32>
    %78 = arith.addf %65, %77 : vector<8x32xf32>
    %c0_38 = arith.constant 0 : index
    %c0_39 = arith.constant 0 : index
    %79 = vector.load %arg13[%c0_38, %c0_39] : memref<1x32xf32, #tpu.memory_space<vmem>>, vector<1x32xf32>
    %c0_40 = arith.constant 0 : index
    %c0_41 = arith.constant 0 : index
    %80 = vector.load %arg14[%c0_40, %c0_41] : memref<1x32xf32, #tpu.memory_space<vmem>>, vector<1x32xf32>
    %cst_42 = arith.constant dense<0.000000e+00> : vector<8xf32>
    %81 = vector.multi_reduction <add>, %78, %cst_42 [1] : vector<8x32xf32> to vector<8xf32>
    %82 = vector.shape_cast %81 : vector<8xf32> to vector<8x1xf32>
    %cst_43 = arith.constant 3.200000e+01 : f32
    %83 = vector.broadcast %cst_43 : f32 to vector<8x1xf32>
    %84 = arith.divf %82, %83 : vector<8x1xf32>
    %85 = vector.broadcast %84 : vector<8x1xf32> to vector<8x32xf32>
    %86 = arith.subf %78, %85 : vector<8x32xf32>
    %87 = arith.mulf %86, %86 : vector<8x32xf32>
    %cst_44 = arith.constant dense<0.000000e+00> : vector<8xf32>
    %88 = vector.multi_reduction <add>, %87, %cst_44 [1] : vector<8x32xf32> to vector<8xf32>
    %89 = vector.shape_cast %88 : vector<8xf32> to vector<8x1xf32>
    %cst_45 = arith.constant 3.200000e+01 : f32
    %90 = vector.broadcast %cst_45 : f32 to vector<8x1xf32>
    %91 = arith.divf %89, %90 : vector<8x1xf32>
    %92 = vector.broadcast %84 : vector<8x1xf32> to vector<8x32xf32>
    %93 = arith.subf %78, %92 : vector<8x32xf32>
    %cst_46 = arith.constant 9.99999974E-6 : f32
    %94 = vector.broadcast %cst_46 : f32 to vector<8x1xf32>
    %95 = arith.addf %91, %94 : vector<8x1xf32>
    %96 = math.rsqrt %95 : vector<8x1xf32>
    %97 = vector.broadcast %96 : vector<8x1xf32> to vector<8x32xf32>
    %98 = arith.mulf %93, %97 : vector<8x32xf32>
    %99 = vector.broadcast %79 : vector<1x32xf32> to vector<8x32xf32>
    %100 = arith.mulf %98, %99 : vector<8x32xf32>
    %101 = vector.broadcast %80 : vector<1x32xf32> to vector<8x32xf32>
    %102 = arith.addf %100, %101 : vector<8x32xf32>
    %c0_47 = arith.constant 0 : index
    %c0_48 = arith.constant 0 : index
    %c0_49 = arith.constant 0 : index
    %103 = vector.load %arg15[%c0_47, %c0_48, %c0_49] : memref<1x8x32xf32, #tpu.memory_space<vmem>>, vector<1x8x32xf32>
    %104 = vector.shape_cast %103 : vector<1x8x32xf32> to vector<8x32xf32>
    %105 = vector.shape_cast %102 : vector<8x32xf32> to vector<1x8x32xf32>
    tpu.vector_store %arg15[%c0_47, %c0_48, %c0_49], %105 {strides = array<i32>} : memref<1x8x32xf32, #tpu.memory_space<vmem>>, vector<1x8x32xf32>,
    return
  }
  func.func @transform_0(%arg0: i32) -> (i32, i32, i32) {
    %c0_i32 = arith.constant 0 : i32
    %c0_i32_0 = arith.constant 0 : i32
    %c0_i32_1 = arith.constant 0 : i32
    return %arg0, %c0_i32, %c0_i32_0 : i32, i32, i32
  }
  func.func @transform_1(%arg0: i32) -> (i32, i32) {
    %c0_i32 = arith.constant 0 : i32
    %c0_i32_0 = arith.constant 0 : i32
    %c0_i32_1 = arith.constant 0 : i32
    return %c0_i32, %c0_i32_0 : i32, i32
  }
  func.func @transform_2(%arg0: i32) -> (i32, i32) {
    %c0_i32 = arith.constant 0 : i32
    %c0_i32_0 = arith.constant 0 : i32
    %c0_i32_1 = arith.constant 0 : i32
    return %c0_i32, %c0_i32_0 : i32, i32
  }
  func.func @transform_3(%arg0: i32) -> (i32, i32) {
    %c0_i32 = arith.constant 0 : i32
    %c0_i32_0 = arith.constant 0 : i32
    %c0_i32_1 = arith.constant 0 : i32
    return %c0_i32, %c0_i32_0 : i32, i32
  }
  func.func @transform_4(%arg0: i32) -> (i32, i32) {
    %c0_i32 = arith.constant 0 : i32
    %c0_i32_0 = arith.constant 0 : i32
    %c0_i32_1 = arith.constant 0 : i32
    return %c0_i32, %c0_i32_0 : i32, i32
  }
  func.func @transform_5(%arg0: i32) -> (i32, i32) {
    %c0_i32 = arith.constant 0 : i32
    %c0_i32_0 = arith.constant 0 : i32
    %c0_i32_1 = arith.constant 0 : i32
    return %c0_i32, %c0_i32_0 : i32, i32
  }
  func.func @transform_6(%arg0: i32) -> (i32, i32) {
    %c0_i32 = arith.constant 0 : i32
    %c0_i32_0 = arith.constant 0 : i32
    %c0_i32_1 = arith.constant 0 : i32
    return %c0_i32, %c0_i32_0 : i32, i32
  }
  func.func @transform_7(%arg0: i32) -> (i32, i32) {
    %c0_i32 = arith.constant 0 : i32
    %c0_i32_0 = arith.constant 0 : i32
    %c0_i32_1 = arith.constant 0 : i32
    return %c0_i32, %c0_i32_0 : i32, i32
  }
  func.func @transform_8(%arg0: i32) -> (i32, i32) {
    %c0_i32 = arith.constant 0 : i32
    %c0_i32_0 = arith.constant 0 : i32
    %c0_i32_1 = arith.constant 0 : i32
    return %c0_i32, %c0_i32_0 : i32, i32
  }
  func.func @transform_9(%arg0: i32) -> (i32, i32) {
    %c0_i32 = arith.constant 0 : i32
    %c0_i32_0 = arith.constant 0 : i32
    %c0_i32_1 = arith.constant 0 : i32
    return %c0_i32, %c0_i32_0 : i32, i32
  }
  func.func @transform_10(%arg0: i32) -> (i32, i32) {
    %c0_i32 = arith.constant 0 : i32
    %c0_i32_0 = arith.constant 0 : i32
    %c0_i32_1 = arith.constant 0 : i32
    return %c0_i32, %c0_i32_0 : i32, i32
  }
  func.func @transform_11(%arg0: i32) -> (i32, i32) {
    %c0_i32 = arith.constant 0 : i32
    %c0_i32_0 = arith.constant 0 : i32
    %c0_i32_1 = arith.constant 0 : i32
    return %c0_i32, %c0_i32_0 : i32, i32
  }
  func.func @transform_12(%arg0: i32) -> (i32, i32) {
    %c0_i32 = arith.constant 0 : i32
    %c0_i32_0 = arith.constant 0 : i32
    %c0_i32_1 = arith.constant 0 : i32
    return %c0_i32, %c0_i32_0 : i32, i32
  }
  func.func @transform_13(%arg0: i32) -> (i32, i32) {
    %c0_i32 = arith.constant 0 : i32
    %c0_i32_0 = arith.constant 0 : i32
    %c0_i32_1 = arith.constant 0 : i32
    return %c0_i32, %c0_i32_0 : i32, i32
  }
  func.func @transform_14(%arg0: i32) -> (i32, i32, i32) {
    %c0_i32 = arith.constant 0 : i32
    %c0_i32_0 = arith.constant 0 : i32
    %c0_i32_1 = arith.constant 0 : i32
    return %arg0, %c0_i32, %c0_i32_0 : i32, i32, i32
  }
}

</mosaic_0001>

<llo_original>
// kernel: tpu_custom_call.1
$region0: #{tpu_custom_call.1}
  #allocation0 [shape = 'u32[]', space=smem, size = 0x4, offset = 0x4, fixed_abs, tag = 'smem constant byte address 0x4 - core index']
  #allocation1 [shape = 'u32[144,128]{1,0:T(1,128)}', space=vmem, size = 0x12000, scoped, tag = 'internal scratch']
  %s0 = inlined_call_operand.hbm [shape: f32[2,8,32], index: 0, kind: input, shape index: {}]
  %s1 = inlined_call_operand.hbm [shape: f32[8,8], index: 1, kind: input, shape index: {}]
  %s2 = inlined_call_operand.vmem [shape: f32[32,96], index: 2, kind: input, shape index: {}]
  %s3 = inlined_call_operand.vmem [shape: f32[1,96], index: 3, kind: input, shape index: {}]
  %s4 = inlined_call_operand.vmem [shape: f32[32,32], index: 4, kind: input, shape index: {}]
  %s5 = inlined_call_operand.vmem [shape: f32[1,32], index: 5, kind: input, shape index: {}]
  %s6 = inlined_call_operand.vmem [shape: f32[1,32], index: 6, kind: input, shape index: {}]
  %s7 = inlined_call_operand.vmem [shape: f32[1,32], index: 7, kind: input, shape index: {}]
  %s8 = inlined_call_operand.vmem [shape: f32[32,64], index: 8, kind: input, shape index: {}]
  %s9 = inlined_call_operand.vmem [shape: f32[1,64], index: 9, kind: input, shape index: {}]
  %s10 = inlined_call_operand.vmem [shape: f32[64,32], index: 10, kind: input, shape index: {}]
  %s11 = inlined_call_operand.vmem [shape: f32[1,32], index: 11, kind: input, shape index: {}]
  %s12 = inlined_call_operand.vmem [shape: f32[1,32], index: 12, kind: input, shape index: {}]
  %s13 = inlined_call_operand.vmem [shape: f32[1,32], index: 13, kind: input, shape index: {}]
  %s14 = inlined_call_operand.hbm [shape: f32[2,8,32], index: 14, kind: output, shape index: {}]
  %s15 = sld [smem:[#allocation0]]
  $region97: #{tpu_custom_call.1} parent=0
    _
  %s17 = ssub.s32 1, %s15
  %s18 = scalar_select 0, %s17, %s15
  $region1: #{tpu_custom_call.1} parent=0
    #allocation2 [shape = 'u8[8192]{0}', space=vmem, size = 0x2000, scoped, tag = 'input window, operand 0']
    #allocation3 [shape = 's32[2]{0}', space=sflag, size = 0x8, scoped, tag = 'scoped memory for tpu_custom_call.1']
    #allocation4 [shape = 's32[2]{0}', space=sflag, size = 0x8, scoped, tag = 'scoped memory for tpu_custom_call.1']
    #allocation5 [shape = 'u8[4096]{0}', space=vmem, size = 0x1000, scoped, tag = 'input window, operand 1, single buffered']
    #allocation6 [shape = 's32[1]{0}', space=sflag, size = 0x4, scoped, tag = 'scoped memory for tpu_custom_call.1']
    #allocation7 [shape = 'u8[8192]{0}', space=vmem, size = 0x2000, scoped, tag = 'output window, operand 0']
    %19 = vsyncpa [#allocation3], 0
    %s20 = scalar_lea.sflag [#allocation3], 1
    %21 = vsyncpa %s20, 0
    %22 = vsyncpa [#allocation6], 0
    %23 = vsyncpa [#allocation4], 0
    %s24 = scalar_lea.sflag [#allocation4], 1
    %25 = vsyncpa %s24, 0
    loop: start=0, step=1, limit=4
    $region2: #{tpu_custom_call.1} parent=1 // loop_pre_header
      _
    $region3: #{tpu_custom_call.1} parent=1 // loop_header
      %s27 = sphi 0, %s31
      %p28 = scmp.ge.s32.totalorder %s27, 4
      %s37 = sphi 0, %s39
      %s40 = sphi 0, %s37
      %s41 = sphi 0, %s40
      %s57 = sphi 0, %s41
      %s61 = sphi 0, %s61
      %s63 = sphi 0, %s61
      %s64 = sphi 0, %s63
      %s78 = sphi 0, %s64
      %s82 = sphi 0, %s82
      %s84 = sphi 0, %s82
      %s85 = sphi 0, %s84
      %s99 = sphi 0, %s85
      %s103 = sphi 0, %s103
      %s105 = sphi 0, %s103
      %s106 = sphi 0, %s105
      %s120 = sphi 0, %s106
      %s124 = sphi 0, %s124
      %s126 = sphi 0, %s124
      %s127 = sphi 0, %s126
      %s141 = sphi 0, %s127
      %s145 = sphi 0, %s145
      %s147 = sphi 0, %s145
      %s148 = sphi 0, %s147
      %s162 = sphi 0, %s148
      %s166 = sphi 0, %s166
      %s168 = sphi 0, %s166
      %s169 = sphi 0, %s168
      %s183 = sphi 0, %s169
      %s187 = sphi 0, %s187
      %s189 = sphi 0, %s187
      %s190 = sphi 0, %s189
      %s204 = sphi 0, %s190
      %s208 = sphi 0, %s208
      %s210 = sphi 0, %s208
      %s211 = sphi 0, %s210
      %s225 = sphi 0, %s211
      %s229 = sphi 0, %s229
      %s231 = sphi 0, %s229
      %s232 = sphi 0, %s231
      %s246 = sphi 0, %s232
      %s250 = sphi 0, %s250
      %s252 = sphi 0, %s250
      %s253 = sphi 0, %s252
      %s267 = sphi 0, %s253
      %s271 = sphi 0, %s271
      %s273 = sphi 0, %s271
      %s274 = sphi 0, %s273
      %s288 = sphi 0, %s274
      %s292 = sphi 0, %s292
      %s294 = sphi 0, %s292
      %s295 = sphi 0, %s294
      %s309 = sphi 0, %s295
      %s313 = sphi 0, %s313
      %s315 = sphi 0, %s313
      %s316 = sphi 0, %s315
      %s330 = sphi 0, %s316
      %s336 = sphi 0, %s338
      %s339 = sphi 0, %s336
      %s340 = sphi 0, %s339
      %s356 = sphi 0, %s340
    $region4: #{tpu_custom_call.1} parent=1 // loop_header_branch
      %30 = sbr.rel (%p28) target = $region8
    $region5: #{tpu_custom_call.1} parent=1 // loop_body
      %s32 = ssub.s32 %s27, 1
      %s33 = ssub.s32 %s27, 2
      %s34 = sadd.s32 %s27, 1
      %s35 = ssub.s32 %s27, %s34
      %p36 = scmp.eq.s32.totalorder %s35, 0
      %s38 = sadd.s32 %s37, 1
      %s39 = scalar_select %p36, %s37, %s38
      %p42 = pneg %p36
      %p43 = scmp.eq.s32.totalorder %s27, 1
      %p44 = por %p42, %p43
      %p45 = scmp.ne.s32.totalorder %s37, %s40
      %p46 = scmp.eq.s32.totalorder %s27, 0
      %p47 = por %p45, %p46
      %p48 = scmp.ne.s32.totalorder %s37, %s40
      %p49 = scmp.eq.s32.totalorder %s32, 1
      %p50 = por %p48, %p49
      %p51 = scmp.ne.s32.totalorder %s40, %s41
      %p52 = scmp.eq.s32.totalorder %s32, 0
      %p53 = por %p51, %p52
      %p54 = scmp.ne.s32.totalorder %s40, %s41
      %p55 = scmp.eq.s32.totalorder %s33, 1
      %p56 = por %p54, %p55
      %p58 = scmp.ne.s32.totalorder %s41, %s57
      %p59 = scmp.eq.s32.totalorder %s33, 0
      %p60 = por %p58, %p59
      %s62 = sadd.s32 %s61, 1
      %p65 = scmp.eq.s32.totalorder %s27, 1
      %p66 = scmp.ne.s32.totalorder %s61, %s63
      %p67 = scmp.eq.s32.totalorder %s27, 0
      %p68 = por %p66, %p67
      %p69 = scmp.ne.s32.totalorder %s61, %s63
      %p70 = scmp.eq.s32.totalorder %s32, 1
      %p71 = por %p69, %p70
      %p72 = scmp.ne.s32.totalorder %s63, %s64
      %p73 = scmp.eq.s32.totalorder %s32, 0
      %p74 = por %p72, %p73
      %p75 = scmp.ne.s32.totalorder %s63, %s64
      %p76 = scmp.eq.s32.totalorder %s33, 1
      %p77 = por %p75, %p76
      %p79 = scmp.ne.s32.totalorder %s64, %s78
      %p80 = scmp.eq.s32.totalorder %s33, 0
      %p81 = por %p79, %p80
      %s83 = sadd.s32 %s82, 1
      %p86 = scmp.eq.s32.totalorder %s27, 1
      %p87 = scmp.ne.s32.totalorder %s82, %s84
      %p88 = scmp.eq.s32.totalorder %s27, 0
      %p89 = por %p87, %p88
      %p90 = scmp.ne.s32.totalorder %s82, %s84
      %p91 = scmp.eq.s32.totalorder %s32, 1
      %p92 = por %p90, %p91
      %p93 = scmp.ne.s32.totalorder %s84, %s85
      %p94 = scmp.eq.s32.totalorder %s32, 0
      %p95 = por %p93, %p94
      %p96 = scmp.ne.s32.totalorder %s84, %s85
      %p97 = scmp.eq.s32.totalorder %s33, 1
      %p98 = por %p96, %p97
      %p100 = scmp.ne.s32.totalorder %s85, %s99
      %p101 = scmp.eq.s32.totalorder %s33, 0
      %p102 = por %p100, %p101
      %s104 = sadd.s32 %s103, 1
      %p107 = scmp.eq.s32.totalorder %s27, 1
      %p108 = scmp.ne.s32.totalorder %s103, %s105
      %p109 = scmp.eq.s32.totalorder %s27, 0
      %p110 = por %p108, %p109
      %p111 = scmp.ne.s32.totalorder %s103, %s105
      %p112 = scmp.eq.s32.totalorder %s32, 1
      %p113 = por %p111, %p112
      %p114 = scmp.ne.s32.totalorder %s105, %s106
      %p115 = scmp.eq.s32.totalorder %s32, 0
      %p116 = por %p114, %p115
      %p117 = scmp.ne.s32.totalorder %s105, %s106
      %p118 = scmp.eq.s32.totalorder %s33, 1
      %p119 = por %p117, %p118
      %p121 = scmp.ne.s32.totalorder %s106, %s120
      %p122 = scmp.eq.s32.totalorder %s33, 0
      %p123 = por %p121, %p122
      %s125 = sadd.s32 %s124, 1
      %p128 = scmp.eq.s32.totalorder %s27, 1
      %p129 = scmp.ne.s32.totalorder %s124, %s126
      %p130 = scmp.eq.s32.totalorder %s27, 0
      %p131 = por %p129, %p130
      %p132 = scmp.ne.s32.totalorder %s124, %s126
      %p133 = scmp.eq.s32.totalorder %s32, 1
      %p134 = por %p132, %p133
      %p135 = scmp.ne.s32.totalorder %s126, %s127
      %p136 = scmp.eq.s32.totalorder %s32, 0
      %p137 = por %p135, %p136
      %p138 = scmp.ne.s32.totalorder %s126, %s127
      %p139 = scmp.eq.s32.totalorder %s33, 1
      %p140 = por %p138, %p139
      %p142 = scmp.ne.s32.totalorder %s127, %s141
      %p143 = scmp.eq.s32.totalorder %s33, 0
      %p144 = por %p142, %p143
      %s146 = sadd.s32 %s145, 1
      %p149 = scmp.eq.s32.totalorder %s27, 1
      %p150 = scmp.ne.s32.totalorder %s145, %s147
      %p151 = scmp.eq.s32.totalorder %s27, 0
      %p152 = por %p150, %p151
      %p153 = scmp.ne.s32.totalorder %s145, %s147
      %p154 = scmp.eq.s32.totalorder %s32, 1
      %p155 = por %p153, %p154
      %p156 = scmp.ne.s32.totalorder %s147, %s148
      %p157 = scmp.eq.s32.totalorder %s32, 0
      %p158 = por %p156, %p157
      %p159 = scmp.ne.s32.totalorder %s147, %s148
      %p160 = scmp.eq.s32.totalorder %s33, 1
      %p161 = por %p159, %p160
      %p163 = scmp.ne.s32.totalorder %s148, %s162
      %p164 = scmp.eq.s32.totalorder %s33, 0
      %p165 = por %p163, %p164
      %s167 = sadd.s32 %s166, 1
      %p170 = scmp.eq.s32.totalorder %s27, 1
      %p171 = scmp.ne.s32.totalorder %s166, %s168
      %p172 = scmp.eq.s32.totalorder %s27, 0
      %p173 = por %p171, %p172
      %p174 = scmp.ne.s32.totalorder %s166, %s168
      %p175 = scmp.eq.s32.totalorder %s32, 1
      %p176 = por %p174, %p175
      %p177 = scmp.ne.s32.totalorder %s168, %s169
      %p178 = scmp.eq.s32.totalorder %s32, 0
      %p179 = por %p177, %p178
      %p180 = scmp.ne.s32.totalorder %s168, %s169
      %p181 = scmp.eq.s32.totalorder %s33, 1
      %p182 = por %p180, %p181
      %p184 = scmp.ne.s32.totalorder %s169, %s183
      %p185 = scmp.eq.s32.totalorder %s33, 0
      %p186 = por %p184, %p185
      %s188 = sadd.s32 %s187, 1
      %p191 = scmp.eq.s32.totalorder %s27, 1
      %p192 = scmp.ne.s32.totalorder %s187, %s189
      %p193 = scmp.eq.s32.totalorder %s27, 0
      %p194 = por %p192, %p193
      %p195 = scmp.ne.s32.totalorder %s187, %s189
      %p196 = scmp.eq.s32.totalorder %s32, 1
      %p197 = por %p195, %p196
      %p198 = scmp.ne.s32.totalorder %s189, %s190
      %p199 = scmp.eq.s32.totalorder %s32, 0
      %p200 = por %p198, %p199
      %p201 = scmp.ne.s32.totalorder %s189, %s190
      %p202 = scmp.eq.s32.totalorder %s33, 1
      %p203 = por %p201, %p202
      %p205 = scmp.ne.s32.totalorder %s190, %s204
      %p206 = scmp.eq.s32.totalorder %s33, 0
      %p207 = por %p205, %p206
      %s209 = sadd.s32 %s208, 1
      %p212 = scmp.eq.s32.totalorder %s27, 1
      %p213 = scmp.ne.s32.totalorder %s208, %s210
      %p214 = scmp.eq.s32.totalorder %s27, 0
      %p215 = por %p213, %p214
      %p216 = scmp.ne.s32.totalorder %s208, %s210
      %p217 = scmp.eq.s32.totalorder %s32, 1
      %p218 = por %p216, %p217
      %p219 = scmp.ne.s32.totalorder %s210, %s211
      %p220 = scmp.eq.s32.totalorder %s32, 0
      %p221 = por %p219, %p220
      %p222 = scmp.ne.s32.totalorder %s210, %s211
      %p223 = scmp.eq.s32.totalorder %s33, 1
      %p224 = por %p222, %p223
      %p226 = scmp.ne.s32.totalorder %s211, %s225
      %p227 = scmp.eq.s32.totalorder %s33, 0
      %p228 = por %p226, %p227
      %s230 = sadd.s32 %s229, 1
      %p233 = scmp.eq.s32.totalorder %s27, 1
      %p234 = scmp.ne.s32.totalorder %s229, %s231
      %p235 = scmp.eq.s32.totalorder %s27, 0
      %p236 = por %p234, %p235
      %p237 = scmp.ne.s32.totalorder %s229, %s231
      %p238 = scmp.eq.s32.totalorder %s32, 1
      %p239 = por %p237, %p238
      %p240 = scmp.ne.s32.totalorder %s231, %s232
      %p241 = scmp.eq.s32.totalorder %s32, 0
      %p242 = por %p240, %p241
      %p243 = scmp.ne.s32.totalorder %s231, %s232
      %p244 = scmp.eq.s32.totalorder %s33, 1
      %p245 = por %p243, %p244
      %p247 = scmp.ne.s32.totalorder %s232, %s246
      %p248 = scmp.eq.s32.totalorder %s33, 0
      %p249 = por %p247, %p248
      %s251 = sadd.s32 %s250, 1
      %p254 = scmp.eq.s32.totalorder %s27, 1
      %p255 = scmp.ne.s32.totalorder %s250, %s252
      %p256 = scmp.eq.s32.totalorder %s27, 0
      %p257 = por %p255, %p256
      %p258 = scmp.ne.s32.totalorder %s250, %s252
      %p259 = scmp.eq.s32.totalorder %s32, 1
      %p260 = por %p258, %p259
      %p261 = scmp.ne.s32.totalorder %s252, %s253
      %p262 = scmp.eq.s32.totalorder %s32, 0
      %p263 = por %p261, %p262
      %p264 = scmp.ne.s32.totalorder %s252, %s253
      %p265 = scmp.eq.s32.totalorder %s33, 1
      %p266 = por %p264, %p265
      %p268 = scmp.ne.s32.totalorder %s253, %s267
      %p269 = scmp.eq.s32.totalorder %s33, 0
      %p270 = por %p268, %p269
      %s272 = sadd.s32 %s271, 1
      %p275 = scmp.eq.s32.totalorder %s27, 1
      %p276 = scmp.ne.s32.totalorder %s271, %s273
      %p277 = scmp.eq.s32.totalorder %s27, 0
      %p278 = por %p276, %p277
      %p279 = scmp.ne.s32.totalorder %s271, %s273
      %p280 = scmp.eq.s32.totalorder %s32, 1
      %p281 = por %p279, %p280
      %p282 = scmp.ne.s32.totalorder %s273, %s274
      %p283 = scmp.eq.s32.totalorder %s32, 0
      %p284 = por %p282, %p283
      %p285 = scmp.ne.s32.totalorder %s273, %s274
      %p286 = scmp.eq.s32.totalorder %s33, 1
      %p287 = por %p285, %p286
      %p289 = scmp.ne.s32.totalorder %s274, %s288
      %p290 = scmp.eq.s32.totalorder %s33, 0
      %p291 = por %p289, %p290
      %s293 = sadd.s32 %s292, 1
      %p296 = scmp.eq.s32.totalorder %s27, 1
      %p297 = scmp.ne.s32.totalorder %s292, %s294
      %p298 = scmp.eq.s32.totalorder %s27, 0
      %p299 = por %p297, %p298
      %p300 = scmp.ne.s32.totalorder %s292, %s294
      %p301 = scmp.eq.s32.totalorder %s32, 1
      %p302 = por %p300, %p301
      %p303 = scmp.ne.s32.totalorder %s294, %s295
      %p304 = scmp.eq.s32.totalorder %s32, 0
      %p305 = por %p303, %p304
      %p306 = scmp.ne.s32.totalorder %s294, %s295
      %p307 = scmp.eq.s32.totalorder %s33, 1
      %p308 = por %p306, %p307
      %p310 = scmp.ne.s32.totalorder %s295, %s309
      %p311 = scmp.eq.s32.totalorder %s33, 0
      %p312 = por %p310, %p311
      %s314 = sadd.s32 %s313, 1
      %p317 = scmp.eq.s32.totalorder %s27, 1
      %p318 = scmp.ne.s32.totalorder %s313, %s315
      %p319 = scmp.eq.s32.totalorder %s27, 0
      %p320 = por %p318, %p319
      %p321 = scmp.ne.s32.totalorder %s313, %s315
      %p322 = scmp.eq.s32.totalorder %s32, 1
      %p323 = por %p321, %p322
      %p324 = scmp.ne.s32.totalorder %s315, %s316
      %p325 = scmp.eq.s32.totalorder %s32, 0
      %p326 = por %p324, %p325
      %p327 = scmp.ne.s32.totalorder %s315, %s316
      %p328 = scmp.eq.s32.totalorder %s33, 1
      %p329 = por %p327, %p328
      %p331 = scmp.ne.s32.totalorder %s316, %s330
      %p332 = scmp.eq.s32.totalorder %s33, 0
      %p333 = por %p331, %p332
      %s334 = ssub.s32 %s27, %s34
      %p335 = scmp.eq.s32.totalorder %s334, 0
      %s337 = sadd.s32 %s336, 1
      %s338 = scalar_select %p335, %s336, %s337
      %p341 = pneg %p335
      %p342 = scmp.eq.s32.totalorder %s27, 1
      %p343 = por %p341, %p342
      %p344 = scmp.ne.s32.totalorder %s336, %s339
      %p345 = scmp.eq.s32.totalorder %s27, 0
      %p346 = por %p344, %p345
      %p347 = scmp.ne.s32.totalorder %s336, %s339
      %p348 = scmp.eq.s32.totalorder %s32, 1
      %p349 = por %p347, %p348
      %p350 = scmp.ne.s32.totalorder %s339, %s340
      %p351 = scmp.eq.s32.totalorder %s32, 0
      %p352 = por %p350, %p351
      %p353 = scmp.ne.s32.totalorder %s339, %s340
      %p354 = scmp.eq.s32.totalorder %s33, 1
      %p355 = por %p353, %p354
      %p357 = scmp.ne.s32.totalorder %s340, %s356
      %p358 = scmp.eq.s32.totalorder %s33, 0
      %p359 = por %p357, %p358
      %p360 = scmp.le.s32.totalorder 1, %s27
      %p361 = scmp.lt.s32.totalorder %s27, 3
      %p362 = pnand %p360, %p361
      %p363 = pneg %p362
      // Predicated region
      $region9: #{tpu_custom_call.1} parent=5 // pred_check
        _
      $region10: #{tpu_custom_call.1} parent=5 // pred_check_branch
        %365 = sbr.rel (%p362) target = $region12
      $region11: #{tpu_custom_call.1} parent=5 // pred_region
        %s366 = ssub.s32 %s27, 1
        // Predicated region
        $region13: #{tpu_custom_call.1} parent=11 // pred_check
          %p367 = pneg %p74
        $region14: #{tpu_custom_call.1} parent=11 // pred_check_branch
          %369 = sbr.rel (%p367) target = $region16
        $region15: #{tpu_custom_call.1} parent=11 // pred_region
          %s371 = ssub.s32 128, 128
          %372 = vsyncadd [#allocation6], %s371
          %s374 = sshll.u32 [#allocation5], 4
          %s375 = int_to_ptr.vmem [resolvable:$true] %s374
          %377 = dma.hbm_to_vmem [thread:$0]  %s1, 128, %s375, [#allocation6]
        $region16: #{tpu_custom_call.1} parent=11 // pred_fallthru
          _
        // Predicated region
        $region17: #{tpu_custom_call.1} parent=11 // pred_check
          %p378 = pneg %p95
        $region18: #{tpu_custom_call.1} parent=11 // pred_check_branch
          %380 = sbr.rel (%p378) target = $region20
        $region19: #{tpu_custom_call.1} parent=11 // pred_region
          _
        $region20: #{tpu_custom_call.1} parent=11 // pred_fallthru
          _
        // Predicated region
        $region21: #{tpu_custom_call.1} parent=11 // pred_check
          %p381 = pneg %p116
        $region22: #{tpu_custom_call.1} parent=11 // pred_check_branch
          %383 = sbr.rel (%p381) target = $region24
        $region23: #{tpu_custom_call.1} parent=11 // pred_region
          _
        $region24: #{tpu_custom_call.1} parent=11 // pred_fallthru
          _
        // Predicated region
        $region25: #{tpu_custom_call.1} parent=11 // pred_check
          %p384 = pneg %p137
        $region26: #{tpu_custom_call.1} parent=11 // pred_check_branch
          %386 = sbr.rel (%p384) target = $region28
        $region27: #{tpu_custom_call.1} parent=11 // pred_region
          _
        $region28: #{tpu_custom_call.1} parent=11 // pred_fallthru
          _
        // Predicated region
        $region29: #{tpu_custom_call.1} parent=11 // pred_check
          %p387 = pneg %p158
        $region30: #{tpu_custom_call.1} parent=11 // pred_check_branch
          %389 = sbr.rel (%p387) target = $region32
        $region31: #{tpu_custom_call.1} parent=11 // pred_region
          _
        $region32: #{tpu_custom_call.1} parent=11 // pred_fallthru
          _
        // Predicated region
        $region33: #{tpu_custom_call.1} parent=11 // pred_check
          %p390 = pneg %p179
        $region34: #{tpu_custom_call.1} parent=11 // pred_check_branch
          %392 = sbr.rel (%p390) target = $region36
        $region35: #{tpu_custom_call.1} parent=11 // pred_region
          _
        $region36: #{tpu_custom_call.1} parent=11 // pred_fallthru
          _
        // Predicated region
        $region37: #{tpu_custom_call.1} parent=11 // pred_check
          %p393 = pneg %p200
        $region38: #{tpu_custom_call.1} parent=11 // pred_check_branch
          %395 = sbr.rel (%p393) target = $region40
        $region39: #{tpu_custom_call.1} parent=11 // pred_region
          _
        $region40: #{tpu_custom_call.1} parent=11 // pred_fallthru
          _
        // Predicated region
        $region41: #{tpu_custom_call.1} parent=11 // pred_check
          %p396 = pneg %p221
        $region42: #{tpu_custom_call.1} parent=11 // pred_check_branch
          %398 = sbr.rel (%p396) target = $region44
        $region43: #{tpu_custom_call.1} parent=11 // pred_region
          _
        $region44: #{tpu_custom_call.1} parent=11 // pred_fallthru
          _
        // Predicated region
        $region45: #{tpu_custom_call.1} parent=11 // pred_check
          %p399 = pneg %p242
        $region46: #{tpu_custom_call.1} parent=11 // pred_check_branch
          %401 = sbr.rel (%p399) target = $region48
        $region47: #{tpu_custom_call.1} parent=11 // pred_region
          _
        $region48: #{tpu_custom_call.1} parent=11 // pred_fallthru
          _
        // Predicated region
        $region49: #{tpu_custom_call.1} parent=11 // pred_check
          %p402 = pneg %p263
        $region50: #{tpu_custom_call.1} parent=11 // pred_check_branch
          %404 = sbr.rel (%p402) target = $region52
        $region51: #{tpu_custom_call.1} parent=11 // pred_region
          _
        $region52: #{tpu_custom_call.1} parent=11 // pred_fallthru
          _
        // Predicated region
        $region53: #{tpu_custom_call.1} parent=11 // pred_check
          %p405 = pneg %p284
        $region54: #{tpu_custom_call.1} parent=11 // pred_check_branch
          %407 = sbr.rel (%p405) target = $region56
        $region55: #{tpu_custom_call.1} parent=11 // pred_region
          _
        $region56: #{tpu_custom_call.1} parent=11 // pred_fallthru
          _
        // Predicated region
        $region57: #{tpu_custom_call.1} parent=11 // pred_check
          %p408 = pneg %p305
        $region58: #{tpu_custom_call.1} parent=11 // pred_check_branch
          %410 = sbr.rel (%p408) target = $region60
        $region59: #{tpu_custom_call.1} parent=11 // pred_region
          _
        $region60: #{tpu_custom_call.1} parent=11 // pred_fallthru
          _
        // Predicated region
        $region61: #{tpu_custom_call.1} parent=11 // pred_check
          %p411 = pneg %p326
        $region62: #{tpu_custom_call.1} parent=11 // pred_check_branch
          %413 = sbr.rel (%p411) target = $region64
        $region63: #{tpu_custom_call.1} parent=11 // pred_region
          _
        $region64: #{tpu_custom_call.1} parent=11 // pred_fallthru
          _
      $region12: #{tpu_custom_call.1} parent=5 // pred_fallthru
        _
      %p414 = scmp.lt.s32.totalorder %s27, 2
      // Predicated region
      $region65: #{tpu_custom_call.1} parent=5 // pred_check
        %p415 = pneg %p414
      $region66: #{tpu_custom_call.1} parent=5 // pred_check_branch
        %417 = sbr.rel (%p415) target = $region68
      $region67: #{tpu_custom_call.1} parent=5 // pred_region
        // Predicated region
        $region69: #{tpu_custom_call.1} parent=67 // pred_check
          %p418 = pneg %p47
        $region70: #{tpu_custom_call.1} parent=67 // pred_check_branch
          %420 = sbr.rel (%p418) target = $region72
        $region71: #{tpu_custom_call.1} parent=67 // pred_region
          %s421 = sand.u32 %s37, 1
          %s422 = scalar_lea.sflag [#allocation3], %s421
          %s423 = sand.u32 %s37, 1
          %s424 = smul.addr %s423, 8
          %s425 = scalar_lea.vmem [#allocation2], %s424
          %s427 = ssub.s32 128, 128
          %428 = vsyncadd %s422, %s427
          %s429 = smul.addr %s27, 128
          %s430 = scalar_lea.hbm %s0, %s429
          %s432 = sshll.u32 %s425, 4
          %s433 = int_to_ptr.vmem [resolvable:$true] %s432
          %435 = dma.hbm_to_vmem [thread:$0]  %s430, 128, %s433, %s422
        $region72: #{tpu_custom_call.1} parent=67 // pred_fallthru
          _
      $region68: #{tpu_custom_call.1} parent=5 // pred_fallthru
        _
      %p436 = scmp.le.s32.totalorder 1, %s27
      %p437 = scmp.lt.s32.totalorder %s27, 3
      %p438 = pnand %p436, %p437
      %p439 = pneg %p438
      // Predicated region
      $region73: #{tpu_custom_call.1} parent=5 // pred_check
        _
      $region74: #{tpu_custom_call.1} parent=5 // pred_check_branch
        %441 = sbr.rel (%p438) target = $region76
      $region75: #{tpu_custom_call.1} parent=5 // pred_region
        %s442 = ssub.s32 %s27, 1
        %s443 = sand.u32 %s40, 1
        %s444 = scalar_lea.sflag [#allocation3], %s443
        %s445 = sand.u32 %s40, 1
        %s446 = smul.addr %s445, 8
        %s447 = scalar_lea.vmem [#allocation2], %s446
        // Predicated region
        $region77: #{tpu_custom_call.1} parent=75 // pred_check
          %p448 = pneg %p53
        $region78: #{tpu_custom_call.1} parent=75 // pred_check_branch
          %450 = sbr.rel (%p448) target = $region80
        $region79: #{tpu_custom_call.1} parent=75 // pred_region
          %451 = dma.done %s444, 128
        $region80: #{tpu_custom_call.1} parent=75 // pred_fallthru
          _
        // Predicated region
        $region81: #{tpu_custom_call.1} parent=75 // pred_check
          %p452 = pneg %p74
        $region82: #{tpu_custom_call.1} parent=75 // pred_check_branch
          %454 = sbr.rel (%p452) target = $region84
        $region83: #{tpu_custom_call.1} parent=75 // pred_region
          %455 = dma.done [#allocation6], 128
        $region84: #{tpu_custom_call.1} parent=75 // pred_fallthru
          _
        %s456 = sand.u32 %s40, 1
        %s457 = scalar_lea.sflag [#allocation3], %s456
        %s458 = sand.u32 %s40, 1
        %s459 = smul.addr %s458, 8
        %s460 = scalar_lea.vmem [#allocation2], %s459
        %p461 = pneg %p53
        %p462 = pneg %p50
        %p463 = pneg %p74
        %p464 = pneg %p71
        %p465 = pneg %p95
        %p466 = pneg %p92
        %p467 = pneg %p116
        %p468 = pneg %p113
        %p469 = pneg %p137
        %p470 = pneg %p134
        %p471 = pneg %p158
        %p472 = pneg %p155
        %p473 = pneg %p179
        %p474 = pneg %p176
        %p475 = pneg %p200
        %p476 = pneg %p197
        %p477 = pneg %p221
        %p478 = pneg %p218
        %p479 = pneg %p242
        %p480 = pneg %p239
        %p481 = pneg %p263
        %p482 = pneg %p260
        %p483 = pneg %p284
        %p484 = pneg %p281
        %p485 = pneg %p305
        %p486 = pneg %p302
        %p487 = pneg %p326
        %p488 = pneg %p323
        %p489 = pneg %p352
        %p490 = pneg %p349
        %s491 = sand.u32 %s339, 1
        %s492 = scalar_lea.sflag [#allocation4], %s491
        %s493 = sand.u32 %s339, 1
        %s494 = smul.addr %s493, 8
        %s495 = scalar_lea.vmem [#allocation7], %s494
        %v496 = vld [vmem:[%s447] sm:$0xff]
        %v497 = vld [vmem:[#allocation5] sm:$0xff]
        %v498 = vld [vmem:[%s2] sm:$0xff]
        %v499 = vld [vmem:[%s2 + $0x8] sm:$0xff]
        %v500 = vld [vmem:[%s2 + $0x10] sm:$0xff]
        %v501 = vld [vmem:[%s2 + $0x18] sm:$0xff]
        %v502 = vld [vmem:[%s3] sm:$0x1]
        %v504 = vlaneseq
        %v505 = vshrl.u32 %v504, 7
        %v506 = vsub.s32 0, %v505
        %v507 = vrot.slane %v502, %v506
        %vm509 = vcmask 261120
        %v511 = vsel %vm509, %v496, 0
        %513 = vmatprep.subr.mxu0 0.0
        %514 = vmatpush1.msra.mxu0 0.0
        %515 = vmatprep.subr.mxu0 0.0
        %516 = vmatpush1.msra.mxu0 0.0
        %517 = vmatprep.subr.mxu0 0.0
        %518 = vmatpush1.msra.mxu0 0.0
        %519 = vmatprep.subr.mxu0 0.0
        %520 = vmatpush1.msra.mxu0 0.0
        %521 = vmatprep.subr.mxu0 0.0
        %522 = vmatpush1.msra.mxu0 0.0
        %523 = vmatprep.subr.mxu0 0.0
        %524 = vmatpush1.msra.mxu0 0.0
        %525 = vmatprep.subr.mxu0 0.0
        %526 = vmatpush1.msra.mxu0 0.0
        %527 = vmatprep.subr.mxu0 0.0
        %528 = vmatpush1.msra.mxu0 0.0
        %529 = vmatprep.subr.mxu0 0.0
        %530 = vmatpush1.msra.mxu0 0.0
        %531 = vmatprep.subr.mxu0 0.0
        %532 = vmatpush1.msra.mxu0 0.0
        %533 = vmatprep.subr.mxu0 0.0
        %534 = vmatpush1.msra.mxu0 0.0
        %535 = vmatprep.subr.mxu0 0.0
        %536 = vmatpush1.msra.mxu0 0.0
        %537 = vmatprep.subr.mxu0 0.0
        %538 = vmatpush1.msra.mxu0 %v501
        %539 = vmatprep.subr.mxu0 0.0
        %540 = vmatpush1.msra.mxu0 %v500
        %541 = vmatprep.subr.mxu0 0.0
        %542 = vmatpush1.msra.mxu0 %v499
        %543 = vmatprep.subr.mxu0 0.0
        %544 = vmatpush1.msra.mxu0 %v498
        %545 = vmatprep.subr.mxu0 0.0
        %546 = vmatpush2.msra.mxu0 0.0
        %547 = vmatprep.subr.mxu0 0.0
        %548 = vmatpush2.msra.mxu0 0.0
        %549 = vmatprep.subr.mxu0 0.0
        %550 = vmatpush2.msra.mxu0 0.0
        %551 = vmatprep.subr.mxu0 0.0
        %552 = vmatpush2.msra.mxu0 0.0
        %553 = vmatprep.subr.mxu0 0.0
        %554 = vmatpush2.msra.mxu0 0.0
        %555 = vmatprep.subr.mxu0 0.0
        %556 = vmatpush2.msra.mxu0 0.0
        %557 = vmatprep.subr.mxu0 0.0
        %558 = vmatpush2.msra.mxu0 0.0
        %559 = vmatprep.subr.mxu0 0.0
        %560 = vmatpush2.msra.mxu0 0.0
        %561 = vmatprep.subr.mxu0 0.0
        %562 = vmatpush2.msra.mxu0 0.0
        %563 = vmatprep.subr.mxu0 0.0
        %564 = vmatpush2.msra.mxu0 0.0
        %565 = vmatprep.subr.mxu0 0.0
        %566 = vmatpush2.msra.mxu0 0.0
        %567 = vmatprep.subr.mxu0 0.0
        %568 = vmatpush2.msra.mxu0 0.0
        %569 = vmatprep.subr.mxu0 0.0
        %570 = vmatpush2.msra.mxu0 0.0
        %571 = vmatprep.subr.mxu0 0.0
        %572 = vmatpush2.msra.mxu0 0.0
        %573 = vmatprep.subr.mxu0 0.0
        %574 = vmatpush2.msra.mxu0 0.0
        %575 = vmatprep.subr.mxu0 0.0
        %576 = vmatpush2.msra.mxu0 0.0
        %577 = vmatprep.mubr.f32.mxu0 0.0
        %578 = vmatmul.mubr.f32.gmra.mxu0 %v511
        %v579 = vpop.f32.mrf.mxu0
        %v580 = vadd.f32 %v507, %v579
        %v581 = vpop.f32.mrf.mxu0
        %582 = vdwg.mxu0
        %584 = vrot.lane.b32.xlu0 %v580, 120
        %v585 = vpop.permute.xlu0 %584
        %587 = vrot.lane.b32.xlu0 %v580, 112
        %v588 = vpop.permute.xlu0 %587
        %590 = vrot.lane.b32.xlu0 %v580, 104
        %v591 = vpop.permute.xlu0 %590
        %v593 = vcombine.low %v580, %v588
        %v594 = vcombine.high %v580, %v588
        %v596 = vunpack.c.l.s4 1983009808
        %v597 = vunpack.c.0.s8 %v596
        %v598 = vlaneseq
        %v599 = vshrl.u32 %v598, 7
        %v600 = vsub.s32 %v597, %v599
        %v601 = vrot.slane %v593, %v600
        %v603 = vunpack.c.l.s4 1983009808
        %v604 = vunpack.c.0.s8 %v603
        %v605 = vlaneseq
        %v606 = vshrl.u32 %v605, 7
        %v607 = vsub.s32 %v604, %v606
        %v608 = vrot.slane %v594, %v607
        %v609 = vcombine.low %v585, %v591
        %v610 = vcombine.high %v585, %v591
        %v612 = vunpack.c.l.s4 1983009808
        %v613 = vunpack.c.0.s8 %v612
        %v614 = vlaneseq
        %v615 = vshrl.u32 %v614, 7
        %v616 = vsub.s32 %v613, %v615
        %v617 = vrot.slane %v609, %v616
        %v619 = vunpack.c.l.s4 1983009808
        %v620 = vunpack.c.0.s8 %v619
        %v621 = vlaneseq
        %v622 = vshrl.u32 %v621, 7
        %v623 = vsub.s32 %v620, %v622
        %v624 = vrot.slane %v610, %v623
        %v625 = vcombine.low %v601, %v617
        %v626 = vcombine.high %v601, %v617
        %v628 = vunpack.c.l.s4 1934713408
        %v629 = vunpack.c.0.s8 %v628
        %v630 = vlaneseq
        %v631 = vshrl.u32 %v630, 7
        %v632 = vsub.s32 %v629, %v631
        %v633 = vrot.slane %v625, %v632
        %v635 = vunpack.c.l.s4 1934713408
        %v636 = vunpack.c.0.s8 %v635
        %v637 = vlaneseq
        %v638 = vshrl.u32 %v637, 7
        %v639 = vsub.s32 %v636, %v638
        %v640 = vrot.slane %v626, %v639
        %v641 = vcombine.low %v608, %v624
        %v642 = vcombine.high %v608, %v624
        %v644 = vunpack.c.l.s4 1934713408
        %v645 = vunpack.c.0.s8 %v644
        %v646 = vlaneseq
        %v647 = vshrl.u32 %v646, 7
        %v648 = vsub.s32 %v645, %v647
        %v649 = vrot.slane %v641, %v648
        %v651 = vunpack.c.l.s4 1934713408
        %v652 = vunpack.c.0.s8 %v651
        %v653 = vlaneseq
        %v654 = vshrl.u32 %v653, 7
        %v655 = vsub.s32 %v652, %v654
        %v656 = vrot.slane %v642, %v655
        %v657 = vcombine.high %v633, 0.0
        %v658 = vcombine.high %v640, 0.0
        %v659 = vcombine.high %v649, 0.0
        %v660 = vcombine.high %v656, 0.0
        %v661 = vcombine.low %v633, %v640
        %v663 = vunpack.c.l.s4 1983009808
        %v664 = vunpack.c.0.s8 %v663
        %v665 = vlaneseq
        %v666 = vshrl.u32 %v665, 7
        %v667 = vsub.s32 %v664, %v666
        %v668 = vrot.slane %v661, %v667
        %v669 = vcombine.low %v657, %v658
        %v671 = vunpack.c.l.s4 1983009808
        %v672 = vunpack.c.0.s8 %v671
        %v673 = vlaneseq
        %v674 = vshrl.u32 %v673, 7
        %v675 = vsub.s32 %v672, %v674
        %v676 = vrot.slane %v669, %v675
        %v677 = vcombine.low %v649, %v656
        %v679 = vunpack.c.l.s4 1983009808
        %v680 = vunpack.c.0.s8 %v679
        %v681 = vlaneseq
        %v682 = vshrl.u32 %v681, 7
        %v683 = vsub.s32 %v680, %v682
        %v684 = vrot.slane %v677, %v683
        %v685 = vcombine.low %v659, %v660
        %v687 = vunpack.c.l.s4 1983009808
        %v688 = vunpack.c.0.s8 %v687
        %v689 = vlaneseq
        %v690 = vshrl.u32 %v689, 7
        %v691 = vsub.s32 %v688, %v690
        %v692 = vrot.slane %v685, %v691
        %v693 = vcombine.low %v668, %v676
        %v694 = vcombine.high %v668, %v676
        %v696 = vunpack.c.l.s4 1934713408
        %v697 = vunpack.c.0.s8 %v696
        %v698 = vlaneseq
        %v699 = vshrl.u32 %v698, 7
        %v700 = vsub.s32 %v697, %v699
        %v701 = vrot.slane %v693, %v700
        %v703 = vunpack.c.l.s4 1934713408
        %v704 = vunpack.c.0.s8 %v703
        %v705 = vlaneseq
        %v706 = vshrl.u32 %v705, 7
        %v707 = vsub.s32 %v704, %v706
        %v708 = vrot.slane %v694, %v707
        %v709 = vcombine.low %v684, %v692
        %v710 = vcombine.high %v684, %v692
        %v712 = vunpack.c.l.s4 1934713408
        %v713 = vunpack.c.0.s8 %v712
        %v714 = vlaneseq
        %v715 = vshrl.u32 %v714, 7
        %v716 = vsub.s32 %v713, %v715
        %v717 = vrot.slane %v709, %v716
        %v719 = vunpack.c.l.s4 1934713408
        %v720 = vunpack.c.0.s8 %v719
        %v721 = vlaneseq
        %v722 = vshrl.u32 %v721, 7
        %v723 = vsub.s32 %v720, %v722
        %v724 = vrot.slane %v710, %v723
        %v725 = vcombine.low %v701, %v717
        %v726 = vcombine.high %v701, %v717
        %v727 = vcombine.low %v708, %v724
        %v728 = vcombine.high %v708, %v724
        %729 = vrot.lane.b32.xlu0 %v580, 96
        %v730 = vpop.permute.xlu0 %729
        %731 = vrot.lane.b32.xlu0 %v585, 96
        %v732 = vpop.permute.xlu0 %731
        %733 = vrot.lane.b32.xlu0 %v588, 96
        %v734 = vpop.permute.xlu0 %733
        %735 = vrot.lane.b32.xlu0 %v591, 96
        %v736 = vpop.permute.xlu0 %735
        %v741 = vcombine.low %v730, %v734
        %v742 = vcombine.high %v730, %v734
        %v744 = vunpack.c.l.s4 1983009808
        %v745 = vunpack.c.0.s8 %v744
        %v746 = vlaneseq
        %v747 = vshrl.u32 %v746, 7
        %v748 = vsub.s32 %v745, %v747
        %v749 = vrot.slane %v741, %v748
        %v751 = vunpack.c.l.s4 1983009808
        %v752 = vunpack.c.0.s8 %v751
        %v753 = vlaneseq
        %v754 = vshrl.u32 %v753, 7
        %v755 = vsub.s32 %v752, %v754
        %v756 = vrot.slane %v742, %v755
        %v757 = vcombine.low %v732, %v736
        %v758 = vcombine.high %v732, %v736
        %v760 = vunpack.c.l.s4 1983009808
        %v761 = vunpack.c.0.s8 %v760
        %v762 = vlaneseq
        %v763 = vshrl.u32 %v762, 7
        %v764 = vsub.s32 %v761, %v763
        %v765 = vrot.slane %v757, %v764
        %v767 = vunpack.c.l.s4 1983009808
        %v768 = vunpack.c.0.s8 %v767
        %v769 = vlaneseq
        %v770 = vshrl.u32 %v769, 7
        %v771 = vsub.s32 %v768, %v770
        %v772 = vrot.slane %v758, %v771
        %v773 = vcombine.low %v749, %v765
        %v774 = vcombine.high %v749, %v765
        %v776 = vunpack.c.l.s4 1934713408
        %v777 = vunpack.c.0.s8 %v776
        %v778 = vlaneseq
        %v779 = vshrl.u32 %v778, 7
        %v780 = vsub.s32 %v777, %v779
        %v781 = vrot.slane %v773, %v780
        %v783 = vunpack.c.l.s4 1934713408
        %v784 = vunpack.c.0.s8 %v783
        %v785 = vlaneseq
        %v786 = vshrl.u32 %v785, 7
        %v787 = vsub.s32 %v784, %v786
        %v788 = vrot.slane %v774, %v787
        %v789 = vcombine.low %v756, %v772
        %v790 = vcombine.high %v756, %v772
        %v792 = vunpack.c.l.s4 1934713408
        %v793 = vunpack.c.0.s8 %v792
        %v794 = vlaneseq
        %v795 = vshrl.u32 %v794, 7
        %v796 = vsub.s32 %v793, %v795
        %v797 = vrot.slane %v789, %v796
        %v799 = vunpack.c.l.s4 1934713408
        %v800 = vunpack.c.0.s8 %v799
        %v801 = vlaneseq
        %v802 = vshrl.u32 %v801, 7
        %v803 = vsub.s32 %v800, %v802
        %v804 = vrot.slane %v790, %v803
        %v805 = vcombine.high %v781, 0.0
        %v806 = vcombine.high %v788, 0.0
        %v807 = vcombine.high %v797, 0.0
        %v808 = vcombine.high %v804, 0.0
        %v809 = vcombine.low %v781, %v788
        %v811 = vunpack.c.l.s4 1983009808
        %v812 = vunpack.c.0.s8 %v811
        %v813 = vlaneseq
        %v814 = vshrl.u32 %v813, 7
        %v815 = vsub.s32 %v812, %v814
        %v816 = vrot.slane %v809, %v815
        %v817 = vcombine.low %v805, %v806
        %v819 = vunpack.c.l.s4 1983009808
        %v820 = vunpack.c.0.s8 %v819
        %v821 = vlaneseq
        %v822 = vshrl.u32 %v821, 7
        %v823 = vsub.s32 %v820, %v822
        %v824 = vrot.slane %v817, %v823
        %v825 = vcombine.low %v797, %v804
        %v827 = vunpack.c.l.s4 1983009808
        %v828 = vunpack.c.0.s8 %v827
        %v829 = vlaneseq
        %v830 = vshrl.u32 %v829, 7
        %v831 = vsub.s32 %v828, %v830
        %v832 = vrot.slane %v825, %v831
        %v833 = vcombine.low %v807, %v808
        %v835 = vunpack.c.l.s4 1983009808
        %v836 = vunpack.c.0.s8 %v835
        %v837 = vlaneseq
        %v838 = vshrl.u32 %v837, 7
        %v839 = vsub.s32 %v836, %v838
        %v840 = vrot.slane %v833, %v839
        %v841 = vcombine.low %v816, %v824
        %v842 = vcombine.high %v816, %v824
        %v844 = vunpack.c.l.s4 1934713408
        %v845 = vunpack.c.0.s8 %v844
        %v846 = vlaneseq
        %v847 = vshrl.u32 %v846, 7
        %v848 = vsub.s32 %v845, %v847
        %v849 = vrot.slane %v841, %v848
        %v851 = vunpack.c.l.s4 1934713408
        %v852 = vunpack.c.0.s8 %v851
        %v853 = vlaneseq
        %v854 = vshrl.u32 %v853, 7
        %v855 = vsub.s32 %v852, %v854
        %v856 = vrot.slane %v842, %v855
        %v857 = vcombine.low %v832, %v840
        %v858 = vcombine.high %v832, %v840
        %v860 = vunpack.c.l.s4 1934713408
        %v861 = vunpack.c.0.s8 %v860
        %v862 = vlaneseq
        %v863 = vshrl.u32 %v862, 7
        %v864 = vsub.s32 %v861, %v863
        %v865 = vrot.slane %v857, %v864
        %v867 = vunpack.c.l.s4 1934713408
        %v868 = vunpack.c.0.s8 %v867
        %v869 = vlaneseq
        %v870 = vshrl.u32 %v869, 7
        %v871 = vsub.s32 %v868, %v870
        %v872 = vrot.slane %v858, %v871
        %v873 = vcombine.low %v849, %v865
        %v874 = vcombine.high %v849, %v865
        %v875 = vcombine.low %v856, %v872
        %v876 = vcombine.high %v856, %v872
        %877 = vrot.lane.b32.xlu0 %v580, 64
        %v878 = vpop.permute.xlu0 %877
        %879 = vrot.lane.b32.xlu0 %v585, 64
        %v880 = vpop.permute.xlu0 %879
        %881 = vrot.lane.b32.xlu0 %v588, 64
        %v882 = vpop.permute.xlu0 %881
        %883 = vrot.lane.b32.xlu0 %v591, 64
        %v884 = vpop.permute.xlu0 %883
        %v889 = vcombine.low %v878, %v882
        %v890 = vcombine.high %v878, %v882
        %v892 = vunpack.c.l.s4 1983009808
        %v893 = vunpack.c.0.s8 %v892
        %v894 = vlaneseq
        %v895 = vshrl.u32 %v894, 7
        %v896 = vsub.s32 %v893, %v895
        %v897 = vrot.slane %v889, %v896
        %v899 = vunpack.c.l.s4 1983009808
        %v900 = vunpack.c.0.s8 %v899
        %v901 = vlaneseq
        %v902 = vshrl.u32 %v901, 7
        %v903 = vsub.s32 %v900, %v902
        %v904 = vrot.slane %v890, %v903
        %v905 = vcombine.low %v880, %v884
        %v906 = vcombine.high %v880, %v884
        %v908 = vunpack.c.l.s4 1983009808
        %v909 = vunpack.c.0.s8 %v908
        %v910 = vlaneseq
        %v911 = vshrl.u32 %v910, 7
        %v912 = vsub.s32 %v909, %v911
        %v913 = vrot.slane %v905, %v912
        %v915 = vunpack.c.l.s4 1983009808
        %v916 = vunpack.c.0.s8 %v915
        %v917 = vlaneseq
        %v918 = vshrl.u32 %v917, 7
        %v919 = vsub.s32 %v916, %v918
        %v920 = vrot.slane %v906, %v919
        %v921 = vcombine.low %v897, %v913
        %v922 = vcombine.high %v897, %v913
        %v924 = vunpack.c.l.s4 1934713408
        %v925 = vunpack.c.0.s8 %v924
        %v926 = vlaneseq
        %v927 = vshrl.u32 %v926, 7
        %v928 = vsub.s32 %v925, %v927
        %v929 = vrot.slane %v921, %v928
        %v931 = vunpack.c.l.s4 1934713408
        %v932 = vunpack.c.0.s8 %v931
        %v933 = vlaneseq
        %v934 = vshrl.u32 %v933, 7
        %v935 = vsub.s32 %v932, %v934
        %v936 = vrot.slane %v922, %v935
        %v937 = vcombine.low %v904, %v920
        %v938 = vcombine.high %v904, %v920
        %v940 = vunpack.c.l.s4 1934713408
        %v941 = vunpack.c.0.s8 %v940
        %v942 = vlaneseq
        %v943 = vshrl.u32 %v942, 7
        %v944 = vsub.s32 %v941, %v943
        %v945 = vrot.slane %v937, %v944
        %v947 = vunpack.c.l.s4 1934713408
        %v948 = vunpack.c.0.s8 %v947
        %v949 = vlaneseq
        %v950 = vshrl.u32 %v949, 7
        %v951 = vsub.s32 %v948, %v950
        %v952 = vrot.slane %v938, %v951
        %v953 = vcombine.high %v929, 0.0
        %v954 = vcombine.high %v936, 0.0
        %v955 = vcombine.high %v945, 0.0
        %v956 = vcombine.high %v952, 0.0
        %v957 = vcombine.low %v929, %v936
        %v959 = vunpack.c.l.s4 1983009808
        %v960 = vunpack.c.0.s8 %v959
        %v961 = vlaneseq
        %v962 = vshrl.u32 %v961, 7
        %v963 = vsub.s32 %v960, %v962
        %v964 = vrot.slane %v957, %v963
        %v965 = vcombine.low %v953, %v954
        %v967 = vunpack.c.l.s4 1983009808
        %v968 = vunpack.c.0.s8 %v967
        %v969 = vlaneseq
        %v970 = vshrl.u32 %v969, 7
        %v971 = vsub.s32 %v968, %v970
        %v972 = vrot.slane %v965, %v971
        %v973 = vcombine.low %v945, %v952
        %v975 = vunpack.c.l.s4 1983009808
        %v976 = vunpack.c.0.s8 %v975
        %v977 = vlaneseq
        %v978 = vshrl.u32 %v977, 7
        %v979 = vsub.s32 %v976, %v978
        %v980 = vrot.slane %v973, %v979
        %v981 = vcombine.low %v955, %v956
        %v983 = vunpack.c.l.s4 1983009808
        %v984 = vunpack.c.0.s8 %v983
        %v985 = vlaneseq
        %v986 = vshrl.u32 %v985, 7
        %v987 = vsub.s32 %v984, %v986
        %v988 = vrot.slane %v981, %v987
        %v989 = vcombine.low %v964, %v972
        %v990 = vcombine.high %v964, %v972
        %v992 = vunpack.c.l.s4 1934713408
        %v993 = vunpack.c.0.s8 %v992
        %v994 = vlaneseq
        %v995 = vshrl.u32 %v994, 7
        %v996 = vsub.s32 %v993, %v995
        %v997 = vrot.slane %v989, %v996
        %v999 = vunpack.c.l.s4 1934713408
        %v1000 = vunpack.c.0.s8 %v999
        %v1001 = vlaneseq
        %v1002 = vshrl.u32 %v1001, 7
        %v1003 = vsub.s32 %v1000, %v1002
        %v1004 = vrot.slane %v990, %v1003
        %v1005 = vcombine.low %v980, %v988
        %v1006 = vcombine.high %v980, %v988
        %v1008 = vunpack.c.l.s4 1934713408
        %v1009 = vunpack.c.0.s8 %v1008
        %v1010 = vlaneseq
        %v1011 = vshrl.u32 %v1010, 7
        %v1012 = vsub.s32 %v1009, %v1011
        %v1013 = vrot.slane %v1005, %v1012
        %v1015 = vunpack.c.l.s4 1934713408
        %v1016 = vunpack.c.0.s8 %v1015
        %v1017 = vlaneseq
        %v1018 = vshrl.u32 %v1017, 7
        %v1019 = vsub.s32 %v1016, %v1018
        %v1020 = vrot.slane %v1006, %v1019
        %v1021 = vcombine.low %v997, %v1013
        %v1022 = vcombine.high %v997, %v1013
        %v1023 = vcombine.low %v1004, %v1020
        %v1024 = vcombine.high %v1004, %v1020
        %vm1025 = vcmask 64512
        %v1027 = vsel %vm1025, %v725, 0
        %v1030 = vsel %vm1025, %v873, 0
        %1032 = vmatprep.subr.mxu0 0.0
        %1033 = vmatpush1.xpose.msra.mxu0 0.0
        %1034 = vmatprep.subr.mxu0 0.0
        %1035 = vmatpush1.xpose.msra.mxu0 0.0
        %1036 = vmatprep.subr.mxu0 0.0
        %1037 = vmatpush1.xpose.msra.mxu0 0.0
        %1038 = vmatprep.subr.mxu0 0.0
        %1039 = vmatpush1.xpose.msra.mxu0 0.0
        %1040 = vmatprep.subr.mxu0 0.0
        %1041 = vmatpush1.xpose.msra.mxu0 0.0
        %1042 = vmatprep.subr.mxu0 0.0
        %1043 = vmatpush1.xpose.msra.mxu0 0.0
        %1044 = vmatprep.subr.mxu0 0.0
        %1045 = vmatpush1.xpose.msra.mxu0 0.0
        %1046 = vmatprep.subr.mxu0 0.0
        %1047 = vmatpush1.xpose.msra.mxu0 0.0
        %1048 = vmatprep.subr.mxu0 0.0
        %1049 = vmatpush1.xpose.msra.mxu0 0.0
        %1050 = vmatprep.subr.mxu0 0.0
        %1051 = vmatpush1.xpose.msra.mxu0 0.0
        %1052 = vmatprep.subr.mxu0 0.0
        %1053 = vmatpush1.xpose.msra.mxu0 0.0
        %1054 = vmatprep.subr.mxu0 0.0
        %1055 = vmatpush1.xpose.msra.mxu0 0.0
        %1056 = vmatprep.subr.mxu0 0.0
        %1057 = vmatpush1.xpose.msra.mxu0 0.0
        %1058 = vmatprep.subr.mxu0 0.0
        %1059 = vmatpush1.xpose.msra.mxu0 0.0
        %1060 = vmatprep.subr.mxu0 0.0
        %1061 = vmatpush1.xpose.msra.mxu0 0.0
        %1062 = vmatprep.subr.mxu0 0.0
        %1063 = vmatpush1.xpose.msra.mxu0 %v1030
        %1064 = vmatprep.subr.mxu0 0.0
        %1065 = vmatpush2.xpose.msra.mxu0 0.0
        %1066 = vmatprep.subr.mxu0 0.0
        %1067 = vmatpush2.xpose.msra.mxu0 0.0
        %1068 = vmatprep.subr.mxu0 0.0
        %1069 = vmatpush2.xpose.msra.mxu0 0.0
        %1070 = vmatprep.subr.mxu0 0.0
        %1071 = vmatpush2.xpose.msra.mxu0 0.0
        %1072 = vmatprep.subr.mxu0 0.0
        %1073 = vmatpush2.xpose.msra.mxu0 0.0
        %1074 = vmatprep.subr.mxu0 0.0
        %1075 = vmatpush2.xpose.msra.mxu0 0.0
        %1076 = vmatprep.subr.mxu0 0.0
        %1077 = vmatpush2.xpose.msra.mxu0 0.0
        %1078 = vmatprep.subr.mxu0 0.0
        %1079 = vmatpush2.xpose.msra.mxu0 0.0
        %1080 = vmatprep.subr.mxu0 0.0
        %1081 = vmatpush2.xpose.msra.mxu0 0.0
        %1082 = vmatprep.subr.mxu0 0.0
        %1083 = vmatpush2.xpose.msra.mxu0 0.0
        %1084 = vmatprep.subr.mxu0 0.0
        %1085 = vmatpush2.xpose.msra.mxu0 0.0
        %1086 = vmatprep.subr.mxu0 0.0
        %1087 = vmatpush2.xpose.msra.mxu0 0.0
        %1088 = vmatprep.subr.mxu0 0.0
        %1089 = vmatpush2.xpose.msra.mxu0 0.0
        %1090 = vmatprep.subr.mxu0 0.0
        %1091 = vmatpush2.xpose.msra.mxu0 0.0
        %1092 = vmatprep.subr.mxu0 0.0
        %1093 = vmatpush2.xpose.msra.mxu0 0.0
        %1094 = vmatprep.subr.mxu0 0.0
        %1095 = vmatpush2.xpose.msra.mxu0 0.0
        %1096 = vmatprep.mubr.f32.mxu0 0.0
        %1097 = vmatmul.mubr.f32.gmra.mxu0 %v1027
        %v1098 = vpop.f32.mrf.mxu0
        %v1099 = vadd.f32 0.0, %v1098
        %v1100 = vpop.f32.mrf.mxu0
        %1101 = vdwg.mxu0
        %v1103 = vsel %vm1025, %v726, 0
        %v1106 = vsel %vm1025, %v874, 0
        %1108 = vmatprep.subr.mxu0 0.0
        %1109 = vmatpush1.xpose.msra.mxu0 0.0
        %1110 = vmatprep.subr.mxu0 0.0
        %1111 = vmatpush1.xpose.msra.mxu0 0.0
        %1112 = vmatprep.subr.mxu0 0.0
        %1113 = vmatpush1.xpose.msra.mxu0 0.0
        %1114 = vmatprep.subr.mxu0 0.0
        %1115 = vmatpush1.xpose.msra.mxu0 0.0
        %1116 = vmatprep.subr.mxu0 0.0
        %1117 = vmatpush1.xpose.msra.mxu0 0.0
        %1118 = vmatprep.subr.mxu0 0.0
        %1119 = vmatpush1.xpose.msra.mxu0 0.0
        %1120 = vmatprep.subr.mxu0 0.0
        %1121 = vmatpush1.xpose.msra.mxu0 0.0
        %1122 = vmatprep.subr.mxu0 0.0
        %1123 = vmatpush1.xpose.msra.mxu0 0.0
        %1124 = vmatprep.subr.mxu0 0.0
        %1125 = vmatpush1.xpose.msra.mxu0 0.0
        %1126 = vmatprep.subr.mxu0 0.0
        %1127 = vmatpush1.xpose.msra.mxu0 0.0
        %1128 = vmatprep.subr.mxu0 0.0
        %1129 = vmatpush1.xpose.msra.mxu0 0.0
        %1130 = vmatprep.subr.mxu0 0.0
        %1131 = vmatpush1.xpose.msra.mxu0 0.0
        %1132 = vmatprep.subr.mxu0 0.0
        %1133 = vmatpush1.xpose.msra.mxu0 0.0
        %1134 = vmatprep.subr.mxu0 0.0
        %1135 = vmatpush1.xpose.msra.mxu0 0.0
        %1136 = vmatprep.subr.mxu0 0.0
        %1137 = vmatpush1.xpose.msra.mxu0 0.0
        %1138 = vmatprep.subr.mxu0 0.0
        %1139 = vmatpush1.xpose.msra.mxu0 %v1106
        %1140 = vmatprep.subr.mxu0 0.0
        %1141 = vmatpush2.xpose.msra.mxu0 0.0
        %1142 = vmatprep.subr.mxu0 0.0
        %1143 = vmatpush2.xpose.msra.mxu0 0.0
        %1144 = vmatprep.subr.mxu0 0.0
        %1145 = vmatpush2.xpose.msra.mxu0 0.0
        %1146 = vmatprep.subr.mxu0 0.0
        %1147 = vmatpush2.xpose.msra.mxu0 0.0
        %1148 = vmatprep.subr.mxu0 0.0
        %1149 = vmatpush2.xpose.msra.mxu0 0.0
        %1150 = vmatprep.subr.mxu0 0.0
        %1151 = vmatpush2.xpose.msra.mxu0 0.0
        %1152 = vmatprep.subr.mxu0 0.0
        %1153 = vmatpush2.xpose.msra.mxu0 0.0
        %1154 = vmatprep.subr.mxu0 0.0
        %1155 = vmatpush2.xpose.msra.mxu0 0.0
        %1156 = vmatprep.subr.mxu0 0.0
        %1157 = vmatpush2.xpose.msra.mxu0 0.0
        %1158 = vmatprep.subr.mxu0 0.0
        %1159 = vmatpush2.xpose.msra.mxu0 0.0
        %1160 = vmatprep.subr.mxu0 0.0
        %1161 = vmatpush2.xpose.msra.mxu0 0.0
        %1162 = vmatprep.subr.mxu0 0.0
        %1163 = vmatpush2.xpose.msra.mxu0 0.0
        %1164 = vmatprep.subr.mxu0 0.0
        %1165 = vmatpush2.xpose.msra.mxu0 0.0
        %1166 = vmatprep.subr.mxu0 0.0
        %1167 = vmatpush2.xpose.msra.mxu0 0.0
        %1168 = vmatprep.subr.mxu0 0.0
        %1169 = vmatpush2.xpose.msra.mxu0 0.0
        %1170 = vmatprep.subr.mxu0 0.0
        %1171 = vmatpush2.xpose.msra.mxu0 0.0
        %1172 = vmatprep.mubr.f32.mxu0 0.0
        %1173 = vmatmul.mubr.f32.gmra.mxu0 %v1103
        %v1174 = vpop.f32.mrf.mxu0
        %v1175 = vadd.f32 0.0, %v1174
        %v1176 = vpop.f32.mrf.mxu0
        %1177 = vdwg.mxu0
        %v1179 = vsel %vm1025, %v727, 0
        %v1182 = vsel %vm1025, %v875, 0
        %1184 = vmatprep.subr.mxu0 0.0
        %1185 = vmatpush1.xpose.msra.mxu0 0.0
        %1186 = vmatprep.subr.mxu0 0.0
        %1187 = vmatpush1.xpose.msra.mxu0 0.0
        %1188 = vmatprep.subr.mxu0 0.0
        %1189 = vmatpush1.xpose.msra.mxu0 0.0
        %1190 = vmatprep.subr.mxu0 0.0
        %1191 = vmatpush1.xpose.msra.mxu0 0.0
        %1192 = vmatprep.subr.mxu0 0.0
        %1193 = vmatpush1.xpose.msra.mxu0 0.0
        %1194 = vmatprep.subr.mxu0 0.0
        %1195 = vmatpush1.xpose.msra.mxu0 0.0
        %1196 = vmatprep.subr.mxu0 0.0
        %1197 = vmatpush1.xpose.msra.mxu0 0.0
        %1198 = vmatprep.subr.mxu0 0.0
        %1199 = vmatpush1.xpose.msra.mxu0 0.0
        %1200 = vmatprep.subr.mxu0 0.0
        %1201 = vmatpush1.xpose.msra.mxu0 0.0
        %1202 = vmatprep.subr.mxu0 0.0
        %1203 = vmatpush1.xpose.msra.mxu0 0.0
        %1204 = vmatprep.subr.mxu0 0.0
        %1205 = vmatpush1.xpose.msra.mxu0 0.0
        %1206 = vmatprep.subr.mxu0 0.0
        %1207 = vmatpush1.xpose.msra.mxu0 0.0
        %1208 = vmatprep.subr.mxu0 0.0
        %1209 = vmatpush1.xpose.msra.mxu0 0.0
        %1210 = vmatprep.subr.mxu0 0.0
        %1211 = vmatpush1.xpose.msra.mxu0 0.0
        %1212 = vmatprep.subr.mxu0 0.0
        %1213 = vmatpush1.xpose.msra.mxu0 0.0
        %1214 = vmatprep.subr.mxu0 0.0
        %1215 = vmatpush1.xpose.msra.mxu0 %v1182
        %1216 = vmatprep.subr.mxu0 0.0
        %1217 = vmatpush2.xpose.msra.mxu0 0.0
        %1218 = vmatprep.subr.mxu0 0.0
        %1219 = vmatpush2.xpose.msra.mxu0 0.0
        %1220 = vmatprep.subr.mxu0 0.0
        %1221 = vmatpush2.xpose.msra.mxu0 0.0
        %1222 = vmatprep.subr.mxu0 0.0
        %1223 = vmatpush2.xpose.msra.mxu0 0.0
        %1224 = vmatprep.subr.mxu0 0.0
        %1225 = vmatpush2.xpose.msra.mxu0 0.0
        %1226 = vmatprep.subr.mxu0 0.0
        %1227 = vmatpush2.xpose.msra.mxu0 0.0
        %1228 = vmatprep.subr.mxu0 0.0
        %1229 = vmatpush2.xpose.msra.mxu0 0.0
        %1230 = vmatprep.subr.mxu0 0.0
        %1231 = vmatpush2.xpose.msra.mxu0 0.0
        %1232 = vmatprep.subr.mxu0 0.0
        %1233 = vmatpush2.xpose.msra.mxu0 0.0
        %1234 = vmatprep.subr.mxu0 0.0
        %1235 = vmatpush2.xpose.msra.mxu0 0.0
        %1236 = vmatprep.subr.mxu0 0.0
        %1237 = vmatpush2.xpose.msra.mxu0 0.0
        %1238 = vmatprep.subr.mxu0 0.0
        %1239 = vmatpush2.xpose.msra.mxu0 0.0
        %1240 = vmatprep.subr.mxu0 0.0
        %1241 = vmatpush2.xpose.msra.mxu0 0.0
        %1242 = vmatprep.subr.mxu0 0.0
        %1243 = vmatpush2.xpose.msra.mxu0 0.0
        %1244 = vmatprep.subr.mxu0 0.0
        %1245 = vmatpush2.xpose.msra.mxu0 0.0
        %1246 = vmatprep.subr.mxu0 0.0
        %1247 = vmatpush2.xpose.msra.mxu0 0.0
        %1248 = vmatprep.mubr.f32.mxu0 0.0
        %1249 = vmatmul.mubr.f32.gmra.mxu0 %v1179
        %v1250 = vpop.f32.mrf.mxu0
        %v1251 = vadd.f32 0.0, %v1250
        %v1252 = vpop.f32.mrf.mxu0
        %1253 = vdwg.mxu0
        %v1255 = vsel %vm1025, %v728, 0
        %v1258 = vsel %vm1025, %v876, 0
        %1260 = vmatprep.subr.mxu0 0.0
        %1261 = vmatpush1.xpose.msra.mxu0 0.0
        %1262 = vmatprep.subr.mxu0 0.0
        %1263 = vmatpush1.xpose.msra.mxu0 0.0
        %1264 = vmatprep.subr.mxu0 0.0
        %1265 = vmatpush1.xpose.msra.mxu0 0.0
        %1266 = vmatprep.subr.mxu0 0.0
        %1267 = vmatpush1.xpose.msra.mxu0 0.0
        %1268 = vmatprep.subr.mxu0 0.0
        %1269 = vmatpush1.xpose.msra.mxu0 0.0
        %1270 = vmatprep.subr.mxu0 0.0
        %1271 = vmatpush1.xpose.msra.mxu0 0.0
        %1272 = vmatprep.subr.mxu0 0.0
        %1273 = vmatpush1.xpose.msra.mxu0 0.0
        %1274 = vmatprep.subr.mxu0 0.0
        %1275 = vmatpush1.xpose.msra.mxu0 0.0
        %1276 = vmatprep.subr.mxu0 0.0
        %1277 = vmatpush1.xpose.msra.mxu0 0.0
        %1278 = vmatprep.subr.mxu0 0.0
        %1279 = vmatpush1.xpose.msra.mxu0 0.0
        %1280 = vmatprep.subr.mxu0 0.0
        %1281 = vmatpush1.xpose.msra.mxu0 0.0
        %1282 = vmatprep.subr.mxu0 0.0
        %1283 = vmatpush1.xpose.msra.mxu0 0.0
        %1284 = vmatprep.subr.mxu0 0.0
        %1285 = vmatpush1.xpose.msra.mxu0 0.0
        %1286 = vmatprep.subr.mxu0 0.0
        %1287 = vmatpush1.xpose.msra.mxu0 0.0
        %1288 = vmatprep.subr.mxu0 0.0
        %1289 = vmatpush1.xpose.msra.mxu0 0.0
        %1290 = vmatprep.subr.mxu0 0.0
        %1291 = vmatpush1.xpose.msra.mxu0 %v1258
        %1292 = vmatprep.subr.mxu0 0.0
        %1293 = vmatpush2.xpose.msra.mxu0 0.0
        %1294 = vmatprep.subr.mxu0 0.0
        %1295 = vmatpush2.xpose.msra.mxu0 0.0
        %1296 = vmatprep.subr.mxu0 0.0
        %1297 = vmatpush2.xpose.msra.mxu0 0.0
        %1298 = vmatprep.subr.mxu0 0.0
        %1299 = vmatpush2.xpose.msra.mxu0 0.0
        %1300 = vmatprep.subr.mxu0 0.0
        %1301 = vmatpush2.xpose.msra.mxu0 0.0
        %1302 = vmatprep.subr.mxu0 0.0
        %1303 = vmatpush2.xpose.msra.mxu0 0.0
        %1304 = vmatprep.subr.mxu0 0.0
        %1305 = vmatpush2.xpose.msra.mxu0 0.0
        %1306 = vmatprep.subr.mxu0 0.0
        %1307 = vmatpush2.xpose.msra.mxu0 0.0
        %1308 = vmatprep.subr.mxu0 0.0
        %1309 = vmatpush2.xpose.msra.mxu0 0.0
        %1310 = vmatprep.subr.mxu0 0.0
        %1311 = vmatpush2.xpose.msra.mxu0 0.0
        %1312 = vmatprep.subr.mxu0 0.0
        %1313 = vmatpush2.xpose.msra.mxu0 0.0
        %1314 = vmatprep.subr.mxu0 0.0
        %1315 = vmatpush2.xpose.msra.mxu0 0.0
        %1316 = vmatprep.subr.mxu0 0.0
        %1317 = vmatpush2.xpose.msra.mxu0 0.0
        %1318 = vmatprep.subr.mxu0 0.0
        %1319 = vmatpush2.xpose.msra.mxu0 0.0
        %1320 = vmatprep.subr.mxu0 0.0
        %1321 = vmatpush2.xpose.msra.mxu0 0.0
        %1322 = vmatprep.subr.mxu0 0.0
        %1323 = vmatpush2.xpose.msra.mxu0 0.0
        %1324 = vmatprep.mubr.f32.mxu0 0.0
        %1325 = vmatmul.mubr.f32.gmra.mxu0 %v1255
        %v1326 = vpop.f32.mrf.mxu0
        %v1327 = vadd.f32 0.0, %v1326
        %v1328 = vpop.f32.mrf.mxu0
        %1329 = vdwg.mxu0
        %v1330 = vmul.f32 %v1099, 0.35355338
        %v1331 = vmul.f32 %v1175, 0.35355338
        %v1332 = vmul.f32 %v1251, 0.35355338
        %v1333 = vmul.f32 %v1327, 0.35355338
        %v1334 = vadd.f32 %v1330, %v497
        %v1335 = vadd.f32 %v1331, %v497
        %v1336 = vadd.f32 %v1332, %v497
        %v1337 = vadd.f32 %v1333, %v497
        %v1338 = vsel %vm1025, %v1334, -inf
        %1339 = vmax.xlane.f32.xlu0 %v1338
        %v1340 = vpop.xlane.xlu0 %1339
        %v1341 = vsel %vm1025, %v1335, -inf
        %1342 = vmax.xlane.f32.xlu0 %v1341
        %v1343 = vpop.xlane.xlu0 %1342
        %v1344 = vsel %vm1025, %v1336, -inf
        %1345 = vmax.xlane.f32.xlu0 %v1344
        %v1346 = vpop.xlane.xlu0 %1345
        %v1347 = vsel %vm1025, %v1337, -inf
        %1348 = vmax.xlane.f32.xlu0 %v1347
        %v1349 = vpop.xlane.xlu0 %1348
        %v1350 = vsub.f32 %v1334, %v1340
        %v1351 = vsub.f32 %v1335, %v1343
        %v1352 = vsub.f32 %v1336, %v1346
        %v1353 = vsub.f32 %v1337, %v1349
        %v1354 = vmul.f32 %v1350, 1.442695
        %v1355 = vpow.pop %v1354
        %v1356 = vmul.f32 %v1351, 1.442695
        %v1357 = vpow.pop %v1356
        %v1358 = vmul.f32 %v1352, 1.442695
        %v1359 = vpow.pop %v1358
        %v1360 = vmul.f32 %v1353, 1.442695
        %v1361 = vpow.pop %v1360
        %v1362 = vsel %vm1025, %v1355, 0.0
        %1363 = vadd.xlane.f32.xlu0 %v1362
        %v1364 = vpop.xlane.xlu0 %1363
        %v1365 = vsel %vm1025, %v1357, 0.0
        %1366 = vadd.xlane.f32.xlu0 %v1365
        %v1367 = vpop.xlane.xlu0 %1366
        %v1368 = vsel %vm1025, %v1359, 0.0
        %1369 = vadd.xlane.f32.xlu0 %v1368
        %v1370 = vpop.xlane.xlu0 %1369
        %v1371 = vsel %vm1025, %v1361, 0.0
        %1372 = vadd.xlane.f32.xlu0 %v1371
        %v1373 = vpop.xlane.xlu0 %1372
        %v1374 = vrcp.pop %v1364
        %v1375 = vrcp.pop %v1367
        %v1376 = vrcp.pop %v1370
        %v1377 = vrcp.pop %v1373
        %v1378 = vmul.f32 %v1355, %v1374
        %v1379 = vmul.f32 %v1357, %v1375
        %v1380 = vmul.f32 %v1359, %v1376
        %v1381 = vmul.f32 %v1361, %v1377
        %v1383 = vsel %vm1025, %v1378, 0
        %1385 = vmatprep.subr.mxu0 0.0
        %1386 = vmatpush1.msra.mxu0 0.0
        %1387 = vmatprep.subr.mxu0 0.0
        %1388 = vmatpush1.msra.mxu0 0.0
        %1389 = vmatprep.subr.mxu0 0.0
        %1390 = vmatpush1.msra.mxu0 0.0
        %1391 = vmatprep.subr.mxu0 0.0
        %1392 = vmatpush1.msra.mxu0 0.0
        %1393 = vmatprep.subr.mxu0 0.0
        %1394 = vmatpush1.msra.mxu0 0.0
        %1395 = vmatprep.subr.mxu0 0.0
        %1396 = vmatpush1.msra.mxu0 0.0
        %1397 = vmatprep.subr.mxu0 0.0
        %1398 = vmatpush1.msra.mxu0 0.0
        %1399 = vmatprep.subr.mxu0 0.0
        %1400 = vmatpush1.msra.mxu0 0.0
        %1401 = vmatprep.subr.mxu0 0.0
        %1402 = vmatpush1.msra.mxu0 0.0
        %1403 = vmatprep.subr.mxu0 0.0
        %1404 = vmatpush1.msra.mxu0 0.0
        %1405 = vmatprep.subr.mxu0 0.0
        %1406 = vmatpush1.msra.mxu0 0.0
        %1407 = vmatprep.subr.mxu0 0.0
        %1408 = vmatpush1.msra.mxu0 0.0
        %1409 = vmatprep.subr.mxu0 0.0
        %1410 = vmatpush1.msra.mxu0 0.0
        %1411 = vmatprep.subr.mxu0 0.0
        %1412 = vmatpush1.msra.mxu0 0.0
        %1413 = vmatprep.subr.mxu0 0.0
        %1414 = vmatpush1.msra.mxu0 0.0
        %1415 = vmatprep.subr.mxu0 0.0
        %1416 = vmatpush1.msra.mxu0 %v1021
        %1417 = vmatprep.subr.mxu0 0.0
        %1418 = vmatpush2.msra.mxu0 0.0
        %1419 = vmatprep.subr.mxu0 0.0
        %1420 = vmatpush2.msra.mxu0 0.0
        %1421 = vmatprep.subr.mxu0 0.0
        %1422 = vmatpush2.msra.mxu0 0.0
        %1423 = vmatprep.subr.mxu0 0.0
        %1424 = vmatpush2.msra.mxu0 0.0
        %1425 = vmatprep.subr.mxu0 0.0
        %1426 = vmatpush2.msra.mxu0 0.0
        %1427 = vmatprep.subr.mxu0 0.0
        %1428 = vmatpush2.msra.mxu0 0.0
        %1429 = vmatprep.subr.mxu0 0.0
        %1430 = vmatpush2.msra.mxu0 0.0
        %1431 = vmatprep.subr.mxu0 0.0
        %1432 = vmatpush2.msra.mxu0 0.0
        %1433 = vmatprep.subr.mxu0 0.0
        %1434 = vmatpush2.msra.mxu0 0.0
        %1435 = vmatprep.subr.mxu0 0.0
        %1436 = vmatpush2.msra.mxu0 0.0
        %1437 = vmatprep.subr.mxu0 0.0
        %1438 = vmatpush2.msra.mxu0 0.0
        %1439 = vmatprep.subr.mxu0 0.0
        %1440 = vmatpush2.msra.mxu0 0.0
        %1441 = vmatprep.subr.mxu0 0.0
        %1442 = vmatpush2.msra.mxu0 0.0
        %1443 = vmatprep.subr.mxu0 0.0
        %1444 = vmatpush2.msra.mxu0 0.0
        %1445 = vmatprep.subr.mxu0 0.0
        %1446 = vmatpush2.msra.mxu0 0.0
        %1447 = vmatprep.subr.mxu0 0.0
        %1448 = vmatpush2.msra.mxu0 0.0
        %1449 = vmatprep.mubr.f32.mxu0 0.0
        %1450 = vmatmul.mubr.f32.gmra.mxu0 %v1383
        %v1451 = vpop.f32.mrf.mxu0
        %v1452 = vadd.f32 0.0, %v1451
        %v1453 = vpop.f32.mrf.mxu0
        %1454 = vdwg.mxu0
        %v1456 = vsel %vm1025, %v1379, 0
        %1458 = vmatprep.subr.mxu0 0.0
        %1459 = vmatpush1.msra.mxu0 0.0
        %1460 = vmatprep.subr.mxu0 0.0
        %1461 = vmatpush1.msra.mxu0 0.0
        %1462 = vmatprep.subr.mxu0 0.0
        %1463 = vmatpush1.msra.mxu0 0.0
        %1464 = vmatprep.subr.mxu0 0.0
        %1465 = vmatpush1.msra.mxu0 0.0
        %1466 = vmatprep.subr.mxu0 0.0
        %1467 = vmatpush1.msra.mxu0 0.0
        %1468 = vmatprep.subr.mxu0 0.0
        %1469 = vmatpush1.msra.mxu0 0.0
        %1470 = vmatprep.subr.mxu0 0.0
        %1471 = vmatpush1.msra.mxu0 0.0
        %1472 = vmatprep.subr.mxu0 0.0
        %1473 = vmatpush1.msra.mxu0 0.0
        %1474 = vmatprep.subr.mxu0 0.0
        %1475 = vmatpush1.msra.mxu0 0.0
        %1476 = vmatprep.subr.mxu0 0.0
        %1477 = vmatpush1.msra.mxu0 0.0
        %1478 = vmatprep.subr.mxu0 0.0
        %1479 = vmatpush1.msra.mxu0 0.0
        %1480 = vmatprep.subr.mxu0 0.0
        %1481 = vmatpush1.msra.mxu0 0.0
        %1482 = vmatprep.subr.mxu0 0.0
        %1483 = vmatpush1.msra.mxu0 0.0
        %1484 = vmatprep.subr.mxu0 0.0
        %1485 = vmatpush1.msra.mxu0 0.0
        %1486 = vmatprep.subr.mxu0 0.0
        %1487 = vmatpush1.msra.mxu0 0.0
        %1488 = vmatprep.subr.mxu0 0.0
        %1489 = vmatpush1.msra.mxu0 %v1022
        %1490 = vmatprep.subr.mxu0 0.0
        %1491 = vmatpush2.msra.mxu0 0.0
        %1492 = vmatprep.subr.mxu0 0.0
        %1493 = vmatpush2.msra.mxu0 0.0
        %1494 = vmatprep.subr.mxu0 0.0
        %1495 = vmatpush2.msra.mxu0 0.0
        %1496 = vmatprep.subr.mxu0 0.0
        %1497 = vmatpush2.msra.mxu0 0.0
        %1498 = vmatprep.subr.mxu0 0.0
        %1499 = vmatpush2.msra.mxu0 0.0
        %1500 = vmatprep.subr.mxu0 0.0
        %1501 = vmatpush2.msra.mxu0 0.0
        %1502 = vmatprep.subr.mxu0 0.0
        %1503 = vmatpush2.msra.mxu0 0.0
        %1504 = vmatprep.subr.mxu0 0.0
        %1505 = vmatpush2.msra.mxu0 0.0
        %1506 = vmatprep.subr.mxu0 0.0
        %1507 = vmatpush2.msra.mxu0 0.0
        %1508 = vmatprep.subr.mxu0 0.0
        %1509 = vmatpush2.msra.mxu0 0.0
        %1510 = vmatprep.subr.mxu0 0.0
        %1511 = vmatpush2.msra.mxu0 0.0
        %1512 = vmatprep.subr.mxu0 0.0
        %1513 = vmatpush2.msra.mxu0 0.0
        %1514 = vmatprep.subr.mxu0 0.0
        %1515 = vmatpush2.msra.mxu0 0.0
        %1516 = vmatprep.subr.mxu0 0.0
        %1517 = vmatpush2.msra.mxu0 0.0
        %1518 = vmatprep.subr.mxu0 0.0
        %1519 = vmatpush2.msra.mxu0 0.0
        %1520 = vmatprep.subr.mxu0 0.0
        %1521 = vmatpush2.msra.mxu0 0.0
        %1522 = vmatprep.mubr.f32.mxu0 0.0
        %1523 = vmatmul.mubr.f32.gmra.mxu0 %v1456
        %v1524 = vpop.f32.mrf.mxu0
        %v1525 = vadd.f32 0.0, %v1524
        %v1526 = vpop.f32.mrf.mxu0
        %1527 = vdwg.mxu0
        %v1529 = vsel %vm1025, %v1380, 0
        %1531 = vmatprep.subr.mxu0 0.0
        %1532 = vmatpush1.msra.mxu0 0.0
        %1533 = vmatprep.subr.mxu0 0.0
        %1534 = vmatpush1.msra.mxu0 0.0
        %1535 = vmatprep.subr.mxu0 0.0
        %1536 = vmatpush1.msra.mxu0 0.0
        %1537 = vmatprep.subr.mxu0 0.0
        %1538 = vmatpush1.msra.mxu0 0.0
        %1539 = vmatprep.subr.mxu0 0.0
        %1540 = vmatpush1.msra.mxu0 0.0
        %1541 = vmatprep.subr.mxu0 0.0
        %1542 = vmatpush1.msra.mxu0 0.0
        %1543 = vmatprep.subr.mxu0 0.0
        %1544 = vmatpush1.msra.mxu0 0.0
        %1545 = vmatprep.subr.mxu0 0.0
        %1546 = vmatpush1.msra.mxu0 0.0
        %1547 = vmatprep.subr.mxu0 0.0
        %1548 = vmatpush1.msra.mxu0 0.0
        %1549 = vmatprep.subr.mxu0 0.0
        %1550 = vmatpush1.msra.mxu0 0.0
        %1551 = vmatprep.subr.mxu0 0.0
        %1552 = vmatpush1.msra.mxu0 0.0
        %1553 = vmatprep.subr.mxu0 0.0
        %1554 = vmatpush1.msra.mxu0 0.0
        %1555 = vmatprep.subr.mxu0 0.0
        %1556 = vmatpush1.msra.mxu0 0.0
        %1557 = vmatprep.subr.mxu0 0.0
        %1558 = vmatpush1.msra.mxu0 0.0
        %1559 = vmatprep.subr.mxu0 0.0
        %1560 = vmatpush1.msra.mxu0 0.0
        %1561 = vmatprep.subr.mxu0 0.0
        %1562 = vmatpush1.msra.mxu0 %v1023
        %1563 = vmatprep.subr.mxu0 0.0
        %1564 = vmatpush2.msra.mxu0 0.0
        %1565 = vmatprep.subr.mxu0 0.0
        %1566 = vmatpush2.msra.mxu0 0.0
        %1567 = vmatprep.subr.mxu0 0.0
        %1568 = vmatpush2.msra.mxu0 0.0
        %1569 = vmatprep.subr.mxu0 0.0
        %1570 = vmatpush2.msra.mxu0 0.0
        %1571 = vmatprep.subr.mxu0 0.0
        %1572 = vmatpush2.msra.mxu0 0.0
        %1573 = vmatprep.subr.mxu0 0.0
        %1574 = vmatpush2.msra.mxu0 0.0
        %1575 = vmatprep.subr.mxu0 0.0
        %1576 = vmatpush2.msra.mxu0 0.0
        %1577 = vmatprep.subr.mxu0 0.0
        %1578 = vmatpush2.msra.mxu0 0.0
        %1579 = vmatprep.subr.mxu0 0.0
        %1580 = vmatpush2.msra.mxu0 0.0
        %1581 = vmatprep.subr.mxu0 0.0
        %1582 = vmatpush2.msra.mxu0 0.0
        %1583 = vmatprep.subr.mxu0 0.0
        %1584 = vmatpush2.msra.mxu0 0.0
        %1585 = vmatprep.subr.mxu0 0.0
        %1586 = vmatpush2.msra.mxu0 0.0
        %1587 = vmatprep.subr.mxu0 0.0
        %1588 = vmatpush2.msra.mxu0 0.0
        %1589 = vmatprep.subr.mxu0 0.0
        %1590 = vmatpush2.msra.mxu0 0.0
        %1591 = vmatprep.subr.mxu0 0.0
        %1592 = vmatpush2.msra.mxu0 0.0
        %1593 = vmatprep.subr.mxu0 0.0
        %1594 = vmatpush2.msra.mxu0 0.0
        %1595 = vmatprep.mubr.f32.mxu0 0.0
        %1596 = vmatmul.mubr.f32.gmra.mxu0 %v1529
        %v1597 = vpop.f32.mrf.mxu0
        %v1598 = vadd.f32 0.0, %v1597
        %v1599 = vpop.f32.mrf.mxu0
        %1600 = vdwg.mxu0
        %v1602 = vsel %vm1025, %v1381, 0
        %1604 = vmatprep.subr.mxu0 0.0
        %1605 = vmatpush1.msra.mxu0 0.0
        %1606 = vmatprep.subr.mxu0 0.0
        %1607 = vmatpush1.msra.mxu0 0.0
        %1608 = vmatprep.subr.mxu0 0.0
        %1609 = vmatpush1.msra.mxu0 0.0
        %1610 = vmatprep.subr.mxu0 0.0
        %1611 = vmatpush1.msra.mxu0 0.0
        %1612 = vmatprep.subr.mxu0 0.0
        %1613 = vmatpush1.msra.mxu0 0.0
        %1614 = vmatprep.subr.mxu0 0.0
        %1615 = vmatpush1.msra.mxu0 0.0
        %1616 = vmatprep.subr.mxu0 0.0
        %1617 = vmatpush1.msra.mxu0 0.0
        %1618 = vmatprep.subr.mxu0 0.0
        %1619 = vmatpush1.msra.mxu0 0.0
        %1620 = vmatprep.subr.mxu0 0.0
        %1621 = vmatpush1.msra.mxu0 0.0
        %1622 = vmatprep.subr.mxu0 0.0
        %1623 = vmatpush1.msra.mxu0 0.0
        %1624 = vmatprep.subr.mxu0 0.0
        %1625 = vmatpush1.msra.mxu0 0.0
        %1626 = vmatprep.subr.mxu0 0.0
        %1627 = vmatpush1.msra.mxu0 0.0
        %1628 = vmatprep.subr.mxu0 0.0
        %1629 = vmatpush1.msra.mxu0 0.0
        %1630 = vmatprep.subr.mxu0 0.0
        %1631 = vmatpush1.msra.mxu0 0.0
        %1632 = vmatprep.subr.mxu0 0.0
        %1633 = vmatpush1.msra.mxu0 0.0
        %1634 = vmatprep.subr.mxu0 0.0
        %1635 = vmatpush1.msra.mxu0 %v1024
        %1636 = vmatprep.subr.mxu0 0.0
        %1637 = vmatpush2.msra.mxu0 0.0
        %1638 = vmatprep.subr.mxu0 0.0
        %1639 = vmatpush2.msra.mxu0 0.0
        %1640 = vmatprep.subr.mxu0 0.0
        %1641 = vmatpush2.msra.mxu0 0.0
        %1642 = vmatprep.subr.mxu0 0.0
        %1643 = vmatpush2.msra.mxu0 0.0
        %1644 = vmatprep.subr.mxu0 0.0
        %1645 = vmatpush2.msra.mxu0 0.0
        %1646 = vmatprep.subr.mxu0 0.0
        %1647 = vmatpush2.msra.mxu0 0.0
        %1648 = vmatprep.subr.mxu0 0.0
        %1649 = vmatpush2.msra.mxu0 0.0
        %1650 = vmatprep.subr.mxu0 0.0
        %1651 = vmatpush2.msra.mxu0 0.0
        %1652 = vmatprep.subr.mxu0 0.0
        %1653 = vmatpush2.msra.mxu0 0.0
        %1654 = vmatprep.subr.mxu0 0.0
        %1655 = vmatpush2.msra.mxu0 0.0
        %1656 = vmatprep.subr.mxu0 0.0
        %1657 = vmatpush2.msra.mxu0 0.0
        %1658 = vmatprep.subr.mxu0 0.0
        %1659 = vmatpush2.msra.mxu0 0.0
        %1660 = vmatprep.subr.mxu0 0.0
        %1661 = vmatpush2.msra.mxu0 0.0
        %1662 = vmatprep.subr.mxu0 0.0
        %1663 = vmatpush2.msra.mxu0 0.0
        %1664 = vmatprep.subr.mxu0 0.0
        %1665 = vmatpush2.msra.mxu0 0.0
        %1666 = vmatprep.subr.mxu0 0.0
        %1667 = vmatpush2.msra.mxu0 0.0
        %1668 = vmatprep.mubr.f32.mxu0 0.0
        %1669 = vmatmul.mubr.f32.gmra.mxu0 %v1602
        %v1670 = vpop.f32.mrf.mxu0
        %v1671 = vadd.f32 0.0, %v1670
        %v1672 = vpop.f32.mrf.mxu0
        %1673 = vdwg.mxu0
        %v1674 = vcombine.low %v1452, %v1598
        %v1675 = vcombine.high %v1452, %v1598
        %v1677 = vunpack.c.l.s4 1983009808
        %v1678 = vunpack.c.0.s8 %v1677
        %v1679 = vlaneseq
        %v1680 = vshrl.u32 %v1679, 7
        %v1681 = vsub.s32 %v1678, %v1680
        %v1682 = vrot.slane %v1674, %v1681
        %v1684 = vunpack.c.l.s4 1983009808
        %v1685 = vunpack.c.0.s8 %v1684
        %v1686 = vlaneseq
        %v1687 = vshrl.u32 %v1686, 7
        %v1688 = vsub.s32 %v1685, %v1687
        %v1689 = vrot.slane %v1675, %v1688
        %v1690 = vcombine.low %v1525, %v1671
        %v1691 = vcombine.high %v1525, %v1671
        %v1693 = vunpack.c.l.s4 1983009808
        %v1694 = vunpack.c.0.s8 %v1693
        %v1695 = vlaneseq
        %v1696 = vshrl.u32 %v1695, 7
        %v1697 = vsub.s32 %v1694, %v1696
        %v1698 = vrot.slane %v1690, %v1697
        %v1700 = vunpack.c.l.s4 1983009808
        %v1701 = vunpack.c.0.s8 %v1700
        %v1702 = vlaneseq
        %v1703 = vshrl.u32 %v1702, 7
        %v1704 = vsub.s32 %v1701, %v1703
        %v1705 = vrot.slane %v1691, %v1704
        %v1706 = vcombine.low %v1682, %v1698
        %v1707 = vcombine.high %v1682, %v1698
        %v1709 = vunpack.c.l.s4 1934713408
        %v1710 = vunpack.c.0.s8 %v1709
        %v1711 = vlaneseq
        %v1712 = vshrl.u32 %v1711, 7
        %v1713 = vsub.s32 %v1710, %v1712
        %v1714 = vrot.slane %v1706, %v1713
        %v1716 = vunpack.c.l.s4 1934713408
        %v1717 = vunpack.c.0.s8 %v1716
        %v1718 = vlaneseq
        %v1719 = vshrl.u32 %v1718, 7
        %v1720 = vsub.s32 %v1717, %v1719
        %v1721 = vrot.slane %v1707, %v1720
        %v1722 = vcombine.low %v1689, %v1705
        %v1723 = vcombine.high %v1689, %v1705
        %v1725 = vunpack.c.l.s4 1934713408
        %v1726 = vunpack.c.0.s8 %v1725
        %v1727 = vlaneseq
        %v1728 = vshrl.u32 %v1727, 7
        %v1729 = vsub.s32 %v1726, %v1728
        %v1730 = vrot.slane %v1722, %v1729
        %v1732 = vunpack.c.l.s4 1934713408
        %v1733 = vunpack.c.0.s8 %v1732
        %v1734 = vlaneseq
        %v1735 = vshrl.u32 %v1734, 7
        %v1736 = vsub.s32 %v1733, %v1735
        %v1737 = vrot.slane %v1723, %v1736
        %v1738 = vcombine.high %v1714, 0.0
        %v1739 = vcombine.high %v1721, 0.0
        %v1740 = vcombine.high %v1730, 0.0
        %v1741 = vcombine.high %v1737, 0.0
        %v1742 = vcombine.low %v1714, %v1721
        %v1744 = vunpack.c.l.s4 1983009808
        %v1745 = vunpack.c.0.s8 %v1744
        %v1746 = vlaneseq
        %v1747 = vshrl.u32 %v1746, 7
        %v1748 = vsub.s32 %v1745, %v1747
        %v1749 = vrot.slane %v1742, %v1748
        %v1750 = vcombine.low %v1738, %v1739
        %v1752 = vunpack.c.l.s4 1983009808
        %v1753 = vunpack.c.0.s8 %v1752
        %v1754 = vlaneseq
        %v1755 = vshrl.u32 %v1754, 7
        %v1756 = vsub.s32 %v1753, %v1755
        %v1757 = vrot.slane %v1750, %v1756
        %v1758 = vcombine.low %v1730, %v1737
        %v1760 = vunpack.c.l.s4 1983009808
        %v1761 = vunpack.c.0.s8 %v1760
        %v1762 = vlaneseq
        %v1763 = vshrl.u32 %v1762, 7
        %v1764 = vsub.s32 %v1761, %v1763
        %v1765 = vrot.slane %v1758, %v1764
        %v1766 = vcombine.low %v1740, %v1741
        %v1768 = vunpack.c.l.s4 1983009808
        %v1769 = vunpack.c.0.s8 %v1768
        %v1770 = vlaneseq
        %v1771 = vshrl.u32 %v1770, 7
        %v1772 = vsub.s32 %v1769, %v1771
        %v1773 = vrot.slane %v1766, %v1772
        %v1774 = vcombine.low %v1749, %v1757
        %v1775 = vcombine.high %v1749, %v1757
        %v1777 = vunpack.c.l.s4 1934713408
        %v1778 = vunpack.c.0.s8 %v1777
        %v1779 = vlaneseq
        %v1780 = vshrl.u32 %v1779, 7
        %v1781 = vsub.s32 %v1778, %v1780
        %v1782 = vrot.slane %v1774, %v1781
        %v1784 = vunpack.c.l.s4 1934713408
        %v1785 = vunpack.c.0.s8 %v1784
        %v1786 = vlaneseq
        %v1787 = vshrl.u32 %v1786, 7
        %v1788 = vsub.s32 %v1785, %v1787
        %v1789 = vrot.slane %v1775, %v1788
        %v1790 = vcombine.low %v1765, %v1773
        %v1791 = vcombine.high %v1765, %v1773
        %v1793 = vunpack.c.l.s4 1934713408
        %v1794 = vunpack.c.0.s8 %v1793
        %v1795 = vlaneseq
        %v1796 = vshrl.u32 %v1795, 7
        %v1797 = vsub.s32 %v1794, %v1796
        %v1798 = vrot.slane %v1790, %v1797
        %v1800 = vunpack.c.l.s4 1934713408
        %v1801 = vunpack.c.0.s8 %v1800
        %v1802 = vlaneseq
        %v1803 = vshrl.u32 %v1802, 7
        %v1804 = vsub.s32 %v1801, %v1803
        %v1805 = vrot.slane %v1791, %v1804
        %v1806 = vcombine.low %v1782, %v1798
        %v1807 = vcombine.high %v1782, %v1798
        %v1808 = vcombine.low %v1789, %v1805
        %v1809 = vcombine.high %v1789, %v1805
        %1811 = vrot.lane.b32.xlu0 %v1807, 8
        %v1812 = vpop.permute.xlu0 %1811
        %1815 = vrot.lane.b32.xlu0 %v1808, 16
        %v1816 = vpop.permute.xlu0 %1815
        %1819 = vrot.lane.b32.xlu0 %v1809, 24
        %v1820 = vpop.permute.xlu0 %1819
        %v1822 = vsel %vm1025, %v1806, %v1812
        %vm1823 = vcmask 130048
        %v1824 = vsel %vm1823, %v1822, %v1816
        %vm1825 = vcmask 195584
        %v1826 = vsel %vm1825, %v1824, %v1820
        %v1827 = vld [vmem:[%s4] sm:$0xff]
        %v1828 = vld [vmem:[%s4 + $0x8] sm:$0xff]
        %v1829 = vld [vmem:[%s4 + $0x10] sm:$0xff]
        %v1830 = vld [vmem:[%s4 + $0x18] sm:$0xff]
        %v1831 = vld [vmem:[%s5] sm:$0x1]
        %v1833 = vlaneseq
        %v1834 = vshrl.u32 %v1833, 7
        %v1835 = vsub.s32 0, %v1834
        %v1836 = vrot.slane %v1831, %v1835
        %v1839 = vsel %vm509, %v1826, 0
        %1841 = vmatprep.subr.mxu0 0.0
        %1842 = vmatpush1.msra.mxu0 0.0
        %1843 = vmatprep.subr.mxu0 0.0
        %1844 = vmatpush1.msra.mxu0 0.0
        %1845 = vmatprep.subr.mxu0 0.0
        %1846 = vmatpush1.msra.mxu0 0.0
        %1847 = vmatprep.subr.mxu0 0.0
        %1848 = vmatpush1.msra.mxu0 0.0
        %1849 = vmatprep.subr.mxu0 0.0
        %1850 = vmatpush1.msra.mxu0 0.0
        %1851 = vmatprep.subr.mxu0 0.0
        %1852 = vmatpush1.msra.mxu0 0.0
        %1853 = vmatprep.subr.mxu0 0.0
        %1854 = vmatpush1.msra.mxu0 0.0
        %1855 = vmatprep.subr.mxu0 0.0
        %1856 = vmatpush1.msra.mxu0 0.0
        %1857 = vmatprep.subr.mxu0 0.0
        %1858 = vmatpush1.msra.mxu0 0.0
        %1859 = vmatprep.subr.mxu0 0.0
        %1860 = vmatpush1.msra.mxu0 0.0
        %1861 = vmatprep.subr.mxu0 0.0
        %1862 = vmatpush1.msra.mxu0 0.0
        %1863 = vmatprep.subr.mxu0 0.0
        %1864 = vmatpush1.msra.mxu0 0.0
        %1865 = vmatprep.subr.mxu0 0.0
        %1866 = vmatpush1.msra.mxu0 %v1830
        %1867 = vmatprep.subr.mxu0 0.0
        %1868 = vmatpush1.msra.mxu0 %v1829
        %1869 = vmatprep.subr.mxu0 0.0
        %1870 = vmatpush1.msra.mxu0 %v1828
        %1871 = vmatprep.subr.mxu0 0.0
        %1872 = vmatpush1.msra.mxu0 %v1827
        %1873 = vmatprep.subr.mxu0 0.0
        %1874 = vmatpush2.msra.mxu0 0.0
        %1875 = vmatprep.subr.mxu0 0.0
        %1876 = vmatpush2.msra.mxu0 0.0
        %1877 = vmatprep.subr.mxu0 0.0
        %1878 = vmatpush2.msra.mxu0 0.0
        %1879 = vmatprep.subr.mxu0 0.0
        %1880 = vmatpush2.msra.mxu0 0.0
        %1881 = vmatprep.subr.mxu0 0.0
        %1882 = vmatpush2.msra.mxu0 0.0
        %1883 = vmatprep.subr.mxu0 0.0
        %1884 = vmatpush2.msra.mxu0 0.0
        %1885 = vmatprep.subr.mxu0 0.0
        %1886 = vmatpush2.msra.mxu0 0.0
        %1887 = vmatprep.subr.mxu0 0.0
        %1888 = vmatpush2.msra.mxu0 0.0
        %1889 = vmatprep.subr.mxu0 0.0
        %1890 = vmatpush2.msra.mxu0 0.0
        %1891 = vmatprep.subr.mxu0 0.0
        %1892 = vmatpush2.msra.mxu0 0.0
        %1893 = vmatprep.subr.mxu0 0.0
        %1894 = vmatpush2.msra.mxu0 0.0
        %1895 = vmatprep.subr.mxu0 0.0
        %1896 = vmatpush2.msra.mxu0 0.0
        %1897 = vmatprep.subr.mxu0 0.0
        %1898 = vmatpush2.msra.mxu0 0.0
        %1899 = vmatprep.subr.mxu0 0.0
        %1900 = vmatpush2.msra.mxu0 0.0
        %1901 = vmatprep.subr.mxu0 0.0
        %1902 = vmatpush2.msra.mxu0 0.0
        %1903 = vmatprep.subr.mxu0 0.0
        %1904 = vmatpush2.msra.mxu0 0.0
        %1905 = vmatprep.mubr.f32.mxu0 0.0
        %1906 = vmatmul.mubr.f32.gmra.mxu0 %v1839
        %v1907 = vpop.f32.mrf.mxu0
        %v1908 = vadd.f32 %v1836, %v1907
        %v1909 = vpop.f32.mrf.mxu0
        %1910 = vdwg.mxu0
        %v1911 = vadd.f32 %v496, %v1908
        %v1912 = vld [vmem:[%s6] sm:$0x1]
        %v1913 = vld [vmem:[%s7] sm:$0x1]
        %v1914 = vsel %vm509, %v1911, 0.0
        %1915 = vadd.xlane.f32.xlu0 %v1914
        %v1916 = vpop.xlane.xlu0 %1915
        %v1917 = vrcp.pop 32.0
        %v1918 = vmul.f32 %v1916, %v1917
        %v1919 = vsub.f32 %v1911, %v1918
        %v1920 = vmul.f32 %v1919, %v1919
        %v1921 = vsel %vm509, %v1920, 0.0
        %1922 = vadd.xlane.f32.xlu0 %v1921
        %v1923 = vpop.xlane.xlu0 %1922
        %v1924 = vmul.f32 %v1923, %v1917
        %v1925 = vadd.f32 %v1924, 1e-05
        %v1926 = vrsqrt.pop %v1925
        %v1927 = vmul.f32 %v1919, %v1926
        %v1929 = vlaneseq
        %v1930 = vshrl.u32 %v1929, 7
        %v1931 = vsub.s32 0, %v1930
        %v1932 = vrot.slane %v1912, %v1931
        %v1934 = vmul.f32 %v1927, %v1932
        %v1936 = vlaneseq
        %v1937 = vshrl.u32 %v1936, 7
        %v1938 = vsub.s32 0, %v1937
        %v1939 = vrot.slane %v1913, %v1938
        %v1941 = vadd.f32 %v1934, %v1939
        %v1942 = vld [vmem:[%s8] sm:$0xff]
        %v1943 = vld [vmem:[%s8 + $0x8] sm:$0xff]
        %v1944 = vld [vmem:[%s8 + $0x10] sm:$0xff]
        %v1945 = vld [vmem:[%s8 + $0x18] sm:$0xff]
        %v1946 = vld [vmem:[%s9] sm:$0x1]
        %v1948 = vlaneseq
        %v1949 = vshrl.u32 %v1948, 7
        %v1950 = vsub.s32 0, %v1949
        %v1951 = vrot.slane %v1946, %v1950
        %v1954 = vsel %vm509, %v1941, 0
        %1956 = vmatprep.subr.mxu0 0.0
        %1957 = vmatpush1.msra.mxu0 0.0
        %1958 = vmatprep.subr.mxu0 0.0
        %1959 = vmatpush1.msra.mxu0 0.0
        %1960 = vmatprep.subr.mxu0 0.0
        %1961 = vmatpush1.msra.mxu0 0.0
        %1962 = vmatprep.subr.mxu0 0.0
        %1963 = vmatpush1.msra.mxu0 0.0
        %1964 = vmatprep.subr.mxu0 0.0
        %1965 = vmatpush1.msra.mxu0 0.0
        %1966 = vmatprep.subr.mxu0 0.0
        %1967 = vmatpush1.msra.mxu0 0.0
        %1968 = vmatprep.subr.mxu0 0.0
        %1969 = vmatpush1.msra.mxu0 0.0
        %1970 = vmatprep.subr.mxu0 0.0
        %1971 = vmatpush1.msra.mxu0 0.0
        %1972 = vmatprep.subr.mxu0 0.0
        %1973 = vmatpush1.msra.mxu0 0.0
        %1974 = vmatprep.subr.mxu0 0.0
        %1975 = vmatpush1.msra.mxu0 0.0
        %1976 = vmatprep.subr.mxu0 0.0
        %1977 = vmatpush1.msra.mxu0 0.0
        %1978 = vmatprep.subr.mxu0 0.0
        %1979 = vmatpush1.msra.mxu0 0.0
        %1980 = vmatprep.subr.mxu0 0.0
        %1981 = vmatpush1.msra.mxu0 %v1945
        %1982 = vmatprep.subr.mxu0 0.0
        %1983 = vmatpush1.msra.mxu0 %v1944
        %1984 = vmatprep.subr.mxu0 0.0
        %1985 = vmatpush1.msra.mxu0 %v1943
        %1986 = vmatprep.subr.mxu0 0.0
        %1987 = vmatpush1.msra.mxu0 %v1942
        %1988 = vmatprep.subr.mxu0 0.0
        %1989 = vmatpush2.msra.mxu0 0.0
        %1990 = vmatprep.subr.mxu0 0.0
        %1991 = vmatpush2.msra.mxu0 0.0
        %1992 = vmatprep.subr.mxu0 0.0
        %1993 = vmatpush2.msra.mxu0 0.0
        %1994 = vmatprep.subr.mxu0 0.0
        %1995 = vmatpush2.msra.mxu0 0.0
        %1996 = vmatprep.subr.mxu0 0.0
        %1997 = vmatpush2.msra.mxu0 0.0
        %1998 = vmatprep.subr.mxu0 0.0
        %1999 = vmatpush2.msra.mxu0 0.0
        %2000 = vmatprep.subr.mxu0 0.0
        %2001 = vmatpush2.msra.mxu0 0.0
        %2002 = vmatprep.subr.mxu0 0.0
        %2003 = vmatpush2.msra.mxu0 0.0
        %2004 = vmatprep.subr.mxu0 0.0
        %2005 = vmatpush2.msra.mxu0 0.0
        %2006 = vmatprep.subr.mxu0 0.0
        %2007 = vmatpush2.msra.mxu0 0.0
        %2008 = vmatprep.subr.mxu0 0.0
        %2009 = vmatpush2.msra.mxu0 0.0
        %2010 = vmatprep.subr.mxu0 0.0
        %2011 = vmatpush2.msra.mxu0 0.0
        %2012 = vmatprep.subr.mxu0 0.0
        %2013 = vmatpush2.msra.mxu0 0.0
        %2014 = vmatprep.subr.mxu0 0.0
        %2015 = vmatpush2.msra.mxu0 0.0
        %2016 = vmatprep.subr.mxu0 0.0
        %2017 = vmatpush2.msra.mxu0 0.0
        %2018 = vmatprep.subr.mxu0 0.0
        %2019 = vmatpush2.msra.mxu0 0.0
        %2020 = vmatprep.mubr.f32.mxu0 0.0
        %2021 = vmatmul.mubr.f32.gmra.mxu0 %v1954
        %v2022 = vpop.f32.mrf.mxu0
        %v2023 = vadd.f32 %v1951, %v2022
        %v2024 = vpop.f32.mrf.mxu0
        %2025 = vdwg.mxu0
        %v2026 = vmax.f32 %v2023, 0.0
        %v2027 = vld [vmem:[%s10] sm:$0xff]
        %v2028 = vld [vmem:[%s10 + $0x8] sm:$0xff]
        %v2029 = vld [vmem:[%s10 + $0x10] sm:$0xff]
        %v2030 = vld [vmem:[%s10 + $0x18] sm:$0xff]
        %v2031 = vld [vmem:[%s10 + $0x20] sm:$0xff]
        %v2032 = vld [vmem:[%s10 + $0x28] sm:$0xff]
        %v2033 = vld [vmem:[%s10 + $0x30] sm:$0xff]
        %v2034 = vld [vmem:[%s10 + $0x38] sm:$0xff]
        %v2035 = vld [vmem:[%s11] sm:$0x1]
        %v2037 = vlaneseq
        %v2038 = vshrl.u32 %v2037, 7
        %v2039 = vsub.s32 0, %v2038
        %v2040 = vrot.slane %v2035, %v2039
        %vm2042 = vcmask 523264
        %v2044 = vsel %vm2042, %v2026, 0
        %2046 = vmatprep.subr.mxu0 0.0
        %2047 = vmatpush1.msra.mxu0 0.0
        %2048 = vmatprep.subr.mxu0 0.0
        %2049 = vmatpush1.msra.mxu0 0.0
        %2050 = vmatprep.subr.mxu0 0.0
        %2051 = vmatpush1.msra.mxu0 0.0
        %2052 = vmatprep.subr.mxu0 0.0
        %2053 = vmatpush1.msra.mxu0 0.0
        %2054 = vmatprep.subr.mxu0 0.0
        %2055 = vmatpush1.msra.mxu0 0.0
        %2056 = vmatprep.subr.mxu0 0.0
        %2057 = vmatpush1.msra.mxu0 0.0
        %2058 = vmatprep.subr.mxu0 0.0
        %2059 = vmatpush1.msra.mxu0 0.0
        %2060 = vmatprep.subr.mxu0 0.0
        %2061 = vmatpush1.msra.mxu0 0.0
        %2062 = vmatprep.subr.mxu0 0.0
        %2063 = vmatpush1.msra.mxu0 %v2034
        %2064 = vmatprep.subr.mxu0 0.0
        %2065 = vmatpush1.msra.mxu0 %v2033
        %2066 = vmatprep.subr.mxu0 0.0
        %2067 = vmatpush1.msra.mxu0 %v2032
        %2068 = vmatprep.subr.mxu0 0.0
        %2069 = vmatpush1.msra.mxu0 %v2031
        %2070 = vmatprep.subr.mxu0 0.0
        %2071 = vmatpush1.msra.mxu0 %v2030
        %2072 = vmatprep.subr.mxu0 0.0
        %2073 = vmatpush1.msra.mxu0 %v2029
        %2074 = vmatprep.subr.mxu0 0.0
        %2075 = vmatpush1.msra.mxu0 %v2028
        %2076 = vmatprep.subr.mxu0 0.0
        %2077 = vmatpush1.msra.mxu0 %v2027
        %2078 = vmatprep.subr.mxu0 0.0
        %2079 = vmatpush2.msra.mxu0 0.0
        %2080 = vmatprep.subr.mxu0 0.0
        %2081 = vmatpush2.msra.mxu0 0.0
        %2082 = vmatprep.subr.mxu0 0.0
        %2083 = vmatpush2.msra.mxu0 0.0
        %2084 = vmatprep.subr.mxu0 0.0
        %2085 = vmatpush2.msra.mxu0 0.0
        %2086 = vmatprep.subr.mxu0 0.0
        %2087 = vmatpush2.msra.mxu0 0.0
        %2088 = vmatprep.subr.mxu0 0.0
        %2089 = vmatpush2.msra.mxu0 0.0
        %2090 = vmatprep.subr.mxu0 0.0
        %2091 = vmatpush2.msra.mxu0 0.0
        %2092 = vmatprep.subr.mxu0 0.0
        %2093 = vmatpush2.msra.mxu0 0.0
        %2094 = vmatprep.subr.mxu0 0.0
        %2095 = vmatpush2.msra.mxu0 0.0
        %2096 = vmatprep.subr.mxu0 0.0
        %2097 = vmatpush2.msra.mxu0 0.0
        %2098 = vmatprep.subr.mxu0 0.0
        %2099 = vmatpush2.msra.mxu0 0.0
        %2100 = vmatprep.subr.mxu0 0.0
        %2101 = vmatpush2.msra.mxu0 0.0
        %2102 = vmatprep.subr.mxu0 0.0
        %2103 = vmatpush2.msra.mxu0 0.0
        %2104 = vmatprep.subr.mxu0 0.0
        %2105 = vmatpush2.msra.mxu0 0.0
        %2106 = vmatprep.subr.mxu0 0.0
        %2107 = vmatpush2.msra.mxu0 0.0
        %2108 = vmatprep.subr.mxu0 0.0
        %2109 = vmatpush2.msra.mxu0 0.0
        %2110 = vmatprep.mubr.f32.mxu0 0.0
        %2111 = vmatmul.mubr.f32.gmra.mxu0 %v2044
        %v2112 = vpop.f32.mrf.mxu0
        %v2113 = vadd.f32 %v2040, %v2112
        %v2114 = vpop.f32.mrf.mxu0
        %2115 = vdwg.mxu0
        %v2116 = vadd.f32 %v1941, %v2113
        %v2117 = vld [vmem:[%s12] sm:$0x1]
        %v2118 = vld [vmem:[%s13] sm:$0x1]
        %v2119 = vsel %vm509, %v2116, 0.0
        %2120 = vadd.xlane.f32.xlu0 %v2119
        %v2121 = vpop.xlane.xlu0 %2120
        %v2122 = vmul.f32 %v2121, %v1917
        %v2123 = vsub.f32 %v2116, %v2122
        %v2124 = vmul.f32 %v2123, %v2123
        %v2125 = vsel %vm509, %v2124, 0.0
        %2126 = vadd.xlane.f32.xlu0 %v2125
        %v2127 = vpop.xlane.xlu0 %2126
        %v2128 = vmul.f32 %v2127, %v1917
        %v2129 = vadd.f32 %v2128, 1e-05
        %v2130 = vrsqrt.pop %v2129
        %v2131 = vmul.f32 %v2123, %v2130
        %v2133 = vlaneseq
        %v2134 = vshrl.u32 %v2133, 7
        %v2135 = vsub.s32 0, %v2134
        %v2136 = vrot.slane %v2117, %v2135
        %v2138 = vmul.f32 %v2131, %v2136
        %v2140 = vlaneseq
        %v2141 = vshrl.u32 %v2140, 7
        %v2142 = vsub.s32 0, %v2141
        %v2143 = vrot.slane %v2118, %v2142
        %v2145 = vadd.f32 %v2138, %v2143
        %2146 = vst.msk [vmem:[%s495] sm:$0xff] %vm509, %v2145
        %s2147 = sand.u32 %s339, 1
        %s2148 = scalar_lea.sflag [#allocation4], %s2147
        %s2149 = sand.u32 %s339, 1
        %s2150 = smul.addr %s2149, 8
        %s2151 = scalar_lea.vmem [#allocation7], %s2150
        // Predicated region
        $region85: #{tpu_custom_call.1} parent=75 // pred_check
          %p2152 = pneg %p349
        $region86: #{tpu_custom_call.1} parent=75 // pred_check_branch
          %2154 = sbr.rel (%p2152) target = $region88
        $region87: #{tpu_custom_call.1} parent=75 // pred_region
          %s2156 = ssub.s32 128, 128
          %2157 = vsyncadd %s2148, %s2156
          %s2158 = smul.addr %s32, 128
          %s2159 = scalar_lea.hbm %s14, %s2158
          %s2161 = sshll.u32 %s2151, 4
          %s2162 = int_to_ptr.vmem [resolvable:$true] %s2161
          %2164 = dma.vmem_to_hbm [thread:$0]  %s2162, 128, %s2159, %s2148
        $region88: #{tpu_custom_call.1} parent=75 // pred_fallthru
          _
      $region76: #{tpu_custom_call.1} parent=5 // pred_fallthru
        _
      %p2165 = scmp.le.s32.totalorder 2, %s27
      // Predicated region
      $region89: #{tpu_custom_call.1} parent=5 // pred_check
        %p2166 = pneg %p2165
      $region90: #{tpu_custom_call.1} parent=5 // pred_check_branch
        %2168 = sbr.rel (%p2166) target = $region92
      $region91: #{tpu_custom_call.1} parent=5 // pred_region
        %s2169 = ssub.s32 %s27, 2
        // Predicated region
        $region93: #{tpu_custom_call.1} parent=91 // pred_check
          %p2170 = pneg %p355
        $region94: #{tpu_custom_call.1} parent=91 // pred_check_branch
          %2172 = sbr.rel (%p2170) target = $region96
        $region95: #{tpu_custom_call.1} parent=91 // pred_region
          %s2173 = sand.u32 %s340, 1
          %s2174 = scalar_lea.sflag [#allocation4], %s2173
          %s2175 = sand.u32 %s340, 1
          %s2176 = smul.addr %s2175, 8
          %s2177 = scalar_lea.vmem [#allocation7], %s2176
          %2178 = dma.done %s2174, 128
        $region96: #{tpu_custom_call.1} parent=91 // pred_fallthru
          _
      $region92: #{tpu_custom_call.1} parent=5 // pred_fallthru
        _
    $region6: #{tpu_custom_call.1} parent=1 // loop_footer
      %s31 = sadd.s32 1, %s27
    $region7: #{tpu_custom_call.1} parent=1 // loop_footer_branch
      %26 = sbr.rel target = $region3
    $region8: #{tpu_custom_call.1} parent=1 // loop_exit
      _
    %2179 = vsyncpa [#allocation3], 1
    %s2180 = scalar_lea.sflag [#allocation3], 1
    %2181 = vsyncpa %s2180, 1
    %2182 = vsyncpa [#allocation6], 1
    %2183 = vsyncpa [#allocation4], 1
    %s2184 = scalar_lea.sflag [#allocation4], 1
    %2185 = vsyncpa %s2184, 1

</llo_original>
